<compile_context>
chip_gen: v7x
topology: tpu7x:2x2x1
jax: 0.10.0
libtpu: 0.0.40
codegen_flags: <defaults>
</compile_context>

<pallas_src>
import functools

import jax
import jax.numpy as jnp
from jax.experimental import pallas as pl
from jax.experimental.pallas import tpu as pltpu

VMEM_BUDGET_BYTES = 48 * 1024 * 1024   # v7x-safe; ~100 MiB is fine on v5e/v6e


def _round_up(n: int, m: int) -> int:
    return ((n + m - 1) // m) * m


# --------------------------------------------------------------------------
# Fused kernel: all layers in one pallas_call, A_hat / x resident in VMEM.
# --------------------------------------------------------------------------
def _jknet_fused_kernel(a_ref, x0_ref, w_ref, b_ref, maxv_ref, arg_ref, x_sc,
                        *, neg_slope: float):
    """grid = (L,), "arbitrary".

    a_ref    [Np, Np]    bf16  A_hat (constant block index -> fetched once)
    x0_ref   [Np, Fp]    f32   x_0   (fetched once)
    w_ref    [1, Fp, Fp] bf16  W_l   (per-layer block)
    b_ref    [1, 1, Fp]  f32   b_l
    maxv_ref [Np, Fp]    f32   output; running JK max  (resident accumulator)
    arg_ref  [Np, Fp]    i32   output; running JK argmax
    x_sc     [Np, Fp]    bf16  scratch; x_{l-1} carried across layer steps
    """
    l = pl.program_id(0)

    @pl.when(l == 0)
    def _():
        x0 = x0_ref[...]
        x_sc[...] = x0.astype(jnp.bfloat16)
        maxv_ref[...] = x0                       # x_0 initializes the JK max
        arg_ref[...] = jnp.zeros_like(arg_ref)   # layer index 0

    # GraphConv (in_feats == out_feats => DGL order): A_hat @ (x @ W) + b
    xw = jnp.dot(x_sc[...], w_ref[0], preferred_element_type=jnp.float32)
    h = jnp.dot(a_ref[...], xw.astype(jnp.bfloat16),
                preferred_element_type=jnp.float32) + b_ref[0]
    xl = jnp.where(h >= 0, h, neg_slope * h)     # LeakyReLU, f32 on the VPU

    # Jumping-knowledge running max / argmax (strict > => earliest layer wins ties,
    # matching jnp.argmax first-occurrence).
    maxv = maxv_ref[...]
    take_new = xl > maxv
    arg_ref[...] = jnp.where(take_new, l + 1, arg_ref[...])
    maxv_ref[...] = jnp.maximum(maxv, xl)
    x_sc[...] = xl.astype(jnp.bfloat16)


# --------------------------------------------------------------------------
# Streaming kernel: one layer, A_hat row slabs, x@W precomputed and resident.
# --------------------------------------------------------------------------
def _jknet_stream_kernel(a_ref, xw_ref, b_ref, maxv_ref, arg_ref,
                         xout_ref, maxvout_ref, argout_ref,
                         *, layer_idx: int, neg_slope: float):
    """grid = (Np // tm,), "parallel" (megacore-shardable row blocks).

    a_ref    [tm, Np]  bf16   A_hat row slab (the only streamed operand)
    xw_ref   [Np, Fp]  bf16   x_{l-1} @ W_l  (constant index -> fetched once)
    b_ref    [1, Fp]   f32
    maxv_ref [tm, Fp]  f32    running max   (aliased with maxvout_ref)
    arg_ref  [tm, Fp]  i32    running argmax(aliased with argout_ref)
    """
    h = jnp.dot(a_ref[...], xw_ref[...],
                preferred_element_type=jnp.float32) + b_ref[...]
    xl = jnp.where(h >= 0, h, neg_slope * h)
    maxv = maxv_ref[...]
    take_new = xl > maxv
    argout_ref[...] = jnp.where(take_new, jnp.int32(layer_idx), arg_ref[...])
    maxvout_ref[...] = jnp.maximum(maxv, xl)
    xout_ref[...] = xl.astype(jnp.bfloat16)


# --------------------------------------------------------------------------
# VMEM planning
# --------------------------------------------------------------------------
def _fused_vmem_need(Np: int, Fp: int) -> int:
    # Conservative: count inputs double-buffered even though their block
    # indices are constant.
    return (2 * Np * Np * 2            # A_hat bf16
            + 2 * Np * Fp * 4          # x_0 f32
            + Np * Fp * 2              # x scratch bf16
            + Np * Fp * (4 + 4)        # maxv / arg outputs
            + 2 * Fp * Fp * 2          # W_l (double-buffered)
            + 2 * Fp * 4)


def _stream_plan(N: int, Fp: int, budget: int):
    Np128 = _round_up(N, 128)
    tm, Np = 128, Np128
    for cand in (512, 256, 128):
        tm_c = min(cand, Np128)
        Np_c = _round_up(N, tm_c)
        need = (2 * tm_c * Np_c * 2              # A row slab, double-buffered
                + 2 * Np_c * Fp * 2              # resident x@W
                + 2 * tm_c * Fp * (4 + 4)        # maxv / arg inputs
                + 2 * tm_c * Fp * (2 + 4 + 4)    # x / maxv / arg outputs
                + 2 * Fp * 4)
        if need <= budget:
            return tm_c, Np_c
    return tm, Np


# --------------------------------------------------------------------------
# Wrapper
# --------------------------------------------------------------------------
@functools.partial(jax.jit,
                   static_argnames=("neg_slope", "force_streaming",
                                    "vmem_budget_bytes"))
def jknet_forward(a_hat, x, weights, biases, *, neg_slope=0.01,
                  force_streaming=False, vmem_budget_bytes=VMEM_BUDGET_BYTES):
    """a_hat: [N,N] f32, x: [N,F] f32, weights: [L,F,F] f32, biases: [L,F] f32.

    Returns (values [N,F] f32, indices [N,F] i32), i.e.
    torch.max(stack([x_0..x_L], dim=-1), dim=-1)."""
    N, F = x.shape
    L = weights.shape[0]
    Fp = _round_up(F, 128)             # lane-dense feature dim

    use_fused = (not force_streaming) and \
        _fused_vmem_need(_round_up(N, 128), Fp) <= vmem_budget_bytes

    if use_fused:
        Np = _round_up(N, 128)
        tm = Np
    else:
        tm, Np = _stream_plan(N, Fp, vmem_budget_bytes)

    # Zero padding keeps the math identical on the first N rows / F columns.
    a_p = jnp.pad(a_hat, ((0, Np - N), (0, Np - N))).astype(jnp.bfloat16)
    x_p = jnp.pad(x, ((0, Np - N), (0, Fp - F))).astype(jnp.float32)
    w_p = jnp.pad(weights, ((0, 0), (0, Fp - F), (0, Fp - F))).astype(jnp.bfloat16)
    b_p = jnp.pad(biases, ((0, 0), (0, Fp - F))).astype(jnp.float32)

    if use_fused:
        flops = L * (2 * Np * Fp * Fp + 2 * Np * Np * Fp)
        bytes_accessed = (Np * Np * 2 + Np * Fp * 4
                          + L * (Fp * Fp * 2 + Fp * 4)
                          + Np * Fp * (4 + 4))
        maxv, arg = pl.pallas_call(
            functools.partial(_jknet_fused_kernel, neg_slope=neg_slope),
            grid=(L,),
            in_specs=[
                pl.BlockSpec((Np, Np), lambda l: (0, 0)),        # A_hat (resident)
                pl.BlockSpec((Np, Fp), lambda l: (0, 0)),        # x_0   (resident)
                pl.BlockSpec((1, Fp, Fp), lambda l: (l, 0, 0)),  # W_l
                pl.BlockSpec((1, 1, Fp), lambda l: (l, 0, 0)),   # b_l
            ],
            out_specs=(
                pl.BlockSpec((Np, Fp), lambda l: (0, 0)),        # JK max
                pl.BlockSpec((Np, Fp), lambda l: (0, 0)),        # JK argmax
            ),
            out_shape=(
                jax.ShapeDtypeStruct((Np, Fp), jnp.float32),
                jax.ShapeDtypeStruct((Np, Fp), jnp.int32),
            ),
            scratch_shapes=[pltpu.VMEM((Np, Fp), jnp.bfloat16)],
            compiler_params=pltpu.CompilerParams(
                dimension_semantics=("arbitrary",),
                vmem_limit_bytes=vmem_budget_bytes),
            cost_estimate=pl.CostEstimate(
                flops=flops, transcendentals=0, bytes_accessed=bytes_accessed),
        )(a_p, x_p, w_p, b_p.reshape(L, 1, Fp))
        return maxv[:N, :F], arg[:N, :F]

    # ---------------- streaming path (A_hat too big for VMEM) ----------------
    maxv = x_p                                   # x_0 initializes the JK max
    arg = jnp.zeros((Np, Fp), jnp.int32)         # layer index 0
    x_cur = x_p.astype(jnp.bfloat16)
    grid = (Np // tm,)
    flops = 2 * Np * Np * Fp
    bytes_accessed = (Np * Np * 2 + Np * Fp * 2 + Fp * 4
                      + Np * Fp * (4 + 4)        # maxv / arg in
                      + Np * Fp * (2 + 4 + 4))   # x / maxv / arg out

    for l in range(L):
        # Associativity hoist: tiny Np*Fp*Fp pre-pass; the streaming kernel then
        # only does the bandwidth-dominant A_hat @ (x W).
        xw = jnp.dot(x_cur, w_p[l],
                     preferred_element_type=jnp.float32).astype(jnp.bfloat16)
        x_cur, maxv, arg = pl.pallas_call(
            functools.partial(_jknet_stream_kernel, layer_idx=l + 1,
                              neg_slope=neg_slope),
            grid=grid,
            in_specs=[
                pl.BlockSpec((tm, Np), lambda i: (i, 0)),   # A_hat row slab
                pl.BlockSpec((Np, Fp), lambda i: (0, 0)),   # x@W (resident)
                pl.BlockSpec((1, Fp), lambda i: (0, 0)),    # b_l
                pl.BlockSpec((tm, Fp), lambda i: (i, 0)),   # running max
                pl.BlockSpec((tm, Fp), lambda i: (i, 0)),   # running argmax
            ],
            out_specs=(
                pl.BlockSpec((tm, Fp), lambda i: (i, 0)),   # x_l (bf16)
                pl.BlockSpec((tm, Fp), lambda i: (i, 0)),   # new max
                pl.BlockSpec((tm, Fp), lambda i: (i, 0)),   # new argmax
            ),
            out_shape=(
                jax.ShapeDtypeStruct((Np, Fp), jnp.bfloat16),
                jax.ShapeDtypeStruct((Np, Fp), jnp.float32),
                jax.ShapeDtypeStruct((Np, Fp), jnp.int32),
            ),
            input_output_aliases={3: 1, 4: 2},              # maxv, arg in place
            compiler_params=pltpu.CompilerParams(
                dimension_semantics=("parallel",),
                vmem_limit_bytes=vmem_budget_bytes),
            cost_estimate=pl.CostEstimate(
                flops=flops, transcendentals=0, bytes_accessed=bytes_accessed),
        )(a_p, xw, b_p[l].reshape(1, Fp), maxv, arg)

    return maxv[:N, :F], arg[:N, :F]


# --------------------------------------------------------------------------
# Test helpers
# --------------------------------------------------------------------------
def build_normalized_adjacency(key, num_nodes, edge_prob=0.3):
    """Random undirected graph -> remove self loops -> add self loops ->
    D^-1/2 (A+I) D^-1/2 (matches DGL GraphConv norm='both' with self loops)."""
    a = jax.random.bernoulli(key, p=edge_prob, shape=(num_nodes, num_nodes))
    a = jnp.logical_or(a, a.T).astype(jnp.float32)          # undirected
    a = a * (1.0 - jnp.eye(num_nodes, dtype=jnp.float32))   # remove_self_loop
    a = a + jnp.eye(num_nodes, dtype=jnp.float32)           # add_self_loop
    deg = jnp.sum(a, axis=1)
    d_inv_sqrt = jnp.where(deg > 0, 1.0 / jnp.sqrt(deg), 0.0)
    return a * d_inv_sqrt[:, None] * d_inv_sqrt[None, :]


def glorot_uniform(key, shape):
    fan_in, fan_out = shape[-2], shape[-1]
    limit = jnp.sqrt(6.0 / (fan_in + fan_out))
    return jax.random.uniform(key, shape, jnp.float32, -limit, limit)


def jknet_reference(a_hat, x, weights, biases, neg_slope=0.01):
    """Pure-JAX reference mirroring the kernel's dtype plan
    (bf16 MXU operands, f32 accumulation and epilogue)."""
    a_bf = a_hat.astype(jnp.bfloat16)
    feats = [x]
    h = x
    for l in range(weights.shape[0]):
        xw = jnp.dot(h.astype(jnp.bfloat16), weights[l].astype(jnp.bfloat16),
                     preferred_element_type=jnp.float32)
        h = jnp.dot(a_bf, xw.astype(jnp.bfloat16),
                    preferred_element_type=jnp.float32) + biases[l][None, :]
        h = jnp.where(h >= 0, h, neg_slope * h)
        feats.append(h)
    stacked = jnp.stack(feats, axis=-1)
    return jnp.max(stacked, axis=-1), jnp.argmax(stacked, axis=-1), stacked


if __name__ == "__main__":
    key = jax.random.PRNGKey(0)
    k_graph, k_feat, k_w, k_b = jax.random.split(key, 4)

    num_nodes = 200      # padded to 256
    in_feat_dim = 48     # padded to 128 lanes
    num_layers = 3       # drop_out / drop_edge are identity in eval mode

    a_hat = build_normalized_adjacency(k_graph, num_nodes)
    in_feat = jax.random.normal(k_feat, (num_nodes, in_feat_dim), jnp.float32)

    w_keys = jax.random.split(k_w, num_layers)
    weights = jnp.stack([glorot_uniform(w_keys[l], (in_feat_dim, in_feat_dim))
                         for l in range(num_layers)])
    # non-zero biases to exercise the bias path (DGL init would be zeros)
    biases = 0.1 * jax.random.normal(k_b, (num_layers, in_feat_dim), jnp.float32)

    ref_values, ref_indices, ref_stack = jknet_reference(a_hat, in_feat,
                                                         weights, biases)
    srt = jnp.sort(ref_stack, axis=-1)
    clear = (srt[..., -1] - srt[..., -2]) > 5e-2   # unambiguous-argmax positions

    # Exercise both the fused path (default for small graphs) and the
    # streaming fallback (used when A_hat does not fit in VMEM).
    for force_streaming in (False, True):
        values, indices = jknet_forward(a_hat, in_feat, weights, biases,
                                        force_streaming=force_streaming)
        values, indices = jax.block_until_ready((values, indices))

        assert values.shape == (num_nodes, in_feat_dim)
        assert indices.shape == (num_nodes, in_feat_dim)
        assert indices.dtype == jnp.int32
        max_err = float(jnp.max(jnp.abs(values - ref_values)))
        assert jnp.allclose(values, ref_values, atol=1e-2, rtol=1e-2), max_err
        assert int(indices.min()) >= 0 and int(indices.max()) <= num_layers
        assert bool(jnp.all(jnp.where(clear, indices == ref_indices, True)))

    print("KERNEL_OK")
</pallas_src>

<mosaic_0001>
module attributes {stable_mosaic.version = 11 : i64} {
  func.func @_jknet_fused_kernel(%arg0: i32, %arg1: memref<256x256xbf16, #tpu.memory_space<vmem>>, %arg2: memref<256x128xf32, #tpu.memory_space<vmem>>, %arg3: memref<1x128x128xbf16, #tpu.memory_space<vmem>>, %arg4: memref<1x1x128xf32, #tpu.memory_space<vmem>>, %arg5: memref<256x128xf32, #tpu.memory_space<vmem>>, %arg6: memref<256x128xi32, #tpu.memory_space<vmem>>, %arg7: memref<256x128xbf16, #tpu.memory_space<vmem>>) attributes {dimension_semantics = [#tpu.dimension_semantics<arbitrary>], iteration_bounds = array<i64: 3>, scalar_prefetch = 0 : i64, scratch_operands = 1 : i64, tpu.core_type = #tpu.core_type<tc>, window_params = [{pipeline_mode = #tpu.pipeline_mode<synchronous>, transform_indices = @transform_0, window_bounds = array<i64: 256, 256>}, {pipeline_mode = #tpu.pipeline_mode<synchronous>, transform_indices = @transform_1, window_bounds = array<i64: 256, 128>}, {transform_indices = @transform_2, window_bounds = array<i64: 1, 128, 128>}, {transform_indices = @transform_3, window_bounds = array<i64: 1, 1, 128>}, {pipeline_mode = #tpu.pipeline_mode<synchronous>, transform_indices = @transform_4, window_bounds = array<i64: 256, 128>}, {pipeline_mode = #tpu.pipeline_mode<synchronous>, transform_indices = @transform_5, window_bounds = array<i64: 256, 128>}]} {
    %c0_i32 = arith.constant 0 : i32
    %0 = arith.cmpi eq, %arg0, %c0_i32 : i32
    %1 = arith.extui %0 : i1 to i32
    %c0_i32_0 = arith.constant 0 : i32
    %2 = arith.cmpi ne, %1, %c0_i32_0 : i32
    scf.if %2 {
      %c0_23 = arith.constant 0 : index
      %c0_24 = arith.constant 0 : index
      %30 = vector.load %arg2[%c0_23, %c0_24] : memref<256x128xf32, #tpu.memory_space<vmem>>, vector<256x128xf32>
      %31 = arith.truncf %30 : vector<256x128xf32> to vector<256x128xbf16>
      %c0_25 = arith.constant 0 : index
      %c0_26 = arith.constant 0 : index
      %32 = vector.load %arg7[%c0_25, %c0_26] : memref<256x128xbf16, #tpu.memory_space<vmem>>, vector<256x128xbf16>
      tpu.vector_store %arg7[%c0_25, %c0_26], %31 {strides = array<i32>} : memref<256x128xbf16, #tpu.memory_space<vmem>>, vector<256x128xbf16>,
      %c0_27 = arith.constant 0 : index
      %c0_28 = arith.constant 0 : index
      %33 = vector.load %arg5[%c0_27, %c0_28] : memref<256x128xf32, #tpu.memory_space<vmem>>, vector<256x128xf32>
      tpu.vector_store %arg5[%c0_27, %c0_28], %30 {strides = array<i32>} : memref<256x128xf32, #tpu.memory_space<vmem>>, vector<256x128xf32>,
      %c0_i32_29 = arith.constant 0 : i32
      %34 = vector.broadcast %c0_i32_29 : i32 to vector<256x128xi32>
      %c0_30 = arith.constant 0 : index
      %c0_31 = arith.constant 0 : index
      %35 = vector.load %arg6[%c0_30, %c0_31] : memref<256x128xi32, #tpu.memory_space<vmem>>, vector<256x128xi32>
      tpu.vector_store %arg6[%c0_30, %c0_31], %34 {strides = array<i32>} : memref<256x128xi32, #tpu.memory_space<vmem>>, vector<256x128xi32>,
    } else {
    }
    %c0 = arith.constant 0 : index
    %c0_1 = arith.constant 0 : index
    %3 = vector.load %arg7[%c0, %c0_1] : memref<256x128xbf16, #tpu.memory_space<vmem>>, vector<256x128xbf16>
    %c0_2 = arith.constant 0 : index
    %c0_3 = arith.constant 0 : index
    %c0_4 = arith.constant 0 : index
    %4 = vector.load %arg3[%c0_2, %c0_3, %c0_4] : memref<1x128x128xbf16, #tpu.memory_space<vmem>>, vector<1x128x128xbf16>
    %5 = vector.shape_cast %4 : vector<1x128x128xbf16> to vector<128x128xbf16>
    %cst = arith.constant dense<0.000000e+00> : vector<256x128xf32>
    %6 = tpu.matmul %3, %5, %cst {dimension_numbers = #tpu.dot_dimension_numbers<[1], [0], [0], [1], [0, 0, 1, 1], [], []>} : vector<256x128xbf16>, vector<128x128xbf16>, vector<256x128xf32> -> vector<256x128xf32>
    %c0_5 = arith.constant 0 : index
    %c0_6 = arith.constant 0 : index
    %7 = vector.load %arg1[%c0_5, %c0_6] : memref<256x256xbf16, #tpu.memory_space<vmem>>, vector<256x256xbf16>
    %8 = arith.truncf %6 : vector<256x128xf32> to vector<256x128xbf16>
    %cst_7 = arith.constant dense<0.000000e+00> : vector<256x128xf32>
    %9 = tpu.matmul %7, %8, %cst_7 {dimension_numbers = #tpu.dot_dimension_numbers<[1], [0], [0], [1], [0, 0, 1, 1], [], []>} : vector<256x256xbf16>, vector<256x128xbf16>, vector<256x128xf32> -> vector<256x128xf32>
    %c0_8 = arith.constant 0 : index
    %c0_9 = arith.constant 0 : index
    %c0_10 = arith.constant 0 : index
    %10 = vector.load %arg4[%c0_8, %c0_9, %c0_10] : memref<1x1x128xf32, #tpu.memory_space<vmem>>, vector<1x1x128xf32>
    %11 = vector.shape_cast %10 : vector<1x1x128xf32> to vector<1x128xf32>
    %12 = vector.broadcast %11 : vector<1x128xf32> to vector<256x128xf32>
    %13 = arith.addf %9, %12 : vector<256x128xf32>
    %cst_11 = arith.constant 0.000000e+00 : f32
    %14 = vector.broadcast %cst_11 : f32 to vector<256x128xf32>
    %15 = arith.cmpf oge, %13, %14 : vector<256x128xf32>
    %cst_12 = arith.constant 0.00999999977 : f32
    %16 = vector.broadcast %cst_12 : f32 to vector<256x128xf32>
    %17 = arith.mulf %16, %13 : vector<256x128xf32>
    %18 = arith.select %15, %13, %17 : vector<256x128xi1>, vector<256x128xf32>
    %c0_13 = arith.constant 0 : index
    %c0_14 = arith.constant 0 : index
    %19 = vector.load %arg5[%c0_13, %c0_14] : memref<256x128xf32, #tpu.memory_space<vmem>>, vector<256x128xf32>
    %20 = arith.cmpf ogt, %18, %19 : vector<256x128xf32>
    %c1_i32 = arith.constant 1 : i32
    %21 = arith.addi %arg0, %c1_i32 : i32
    %c0_15 = arith.constant 0 : index
    %c0_16 = arith.constant 0 : index
    %22 = vector.load %arg6[%c0_15, %c0_16] : memref<256x128xi32, #tpu.memory_space<vmem>>, vector<256x128xi32>
    %23 = vector.broadcast %21 : i32 to vector<256x128xi32>
    %24 = arith.select %20, %23, %22 : vector<256x128xi1>, vector<256x128xi32>
    %c0_17 = arith.constant 0 : index
    %c0_18 = arith.constant 0 : index
    %25 = vector.load %arg6[%c0_17, %c0_18] : memref<256x128xi32, #tpu.memory_space<vmem>>, vector<256x128xi32>
    tpu.vector_store %arg6[%c0_17, %c0_18], %24 {strides = array<i32>} : memref<256x128xi32, #tpu.memory_space<vmem>>, vector<256x128xi32>,
    %26 = arith.maximumf %19, %18 : vector<256x128xf32>
    %c0_19 = arith.constant 0 : index
    %c0_20 = arith.constant 0 : index
    %27 = vector.load %arg5[%c0_19, %c0_20] : memref<256x128xf32, #tpu.memory_space<vmem>>, vector<256x128xf32>
    tpu.vector_store %arg5[%c0_19, %c0_20], %26 {strides = array<i32>} : memref<256x128xf32, #tpu.memory_space<vmem>>, vector<256x128xf32>,
    %28 = arith.truncf %18 : vector<256x128xf32> to vector<256x128xbf16>
    %c0_21 = arith.constant 0 : index
    %c0_22 = arith.constant 0 : index
    %29 = vector.load %arg7[%c0_21, %c0_22] : memref<256x128xbf16, #tpu.memory_space<vmem>>, vector<256x128xbf16>
    tpu.vector_store %arg7[%c0_21, %c0_22], %28 {strides = array<i32>} : memref<256x128xbf16, #tpu.memory_space<vmem>>, vector<256x128xbf16>,
    return
  }
  func.func @transform_0(%arg0: i32) -> (i32, i32) {
    %c0_i32 = arith.constant 0 : i32
    %c0_i32_0 = arith.constant 0 : i32
    %c0_i32_1 = arith.constant 0 : i32
    return %c0_i32, %c0_i32_0 : i32, i32
  }
  func.func @transform_1(%arg0: i32) -> (i32, i32) {
    %c0_i32 = arith.constant 0 : i32
    %c0_i32_0 = arith.constant 0 : i32
    %c0_i32_1 = arith.constant 0 : i32
    return %c0_i32, %c0_i32_0 : i32, i32
  }
  func.func @transform_2(%arg0: i32) -> (i32, i32, i32) {
    %c0_i32 = arith.constant 0 : i32
    %c0_i32_0 = arith.constant 0 : i32
    %c0_i32_1 = arith.constant 0 : i32
    return %arg0, %c0_i32, %c0_i32_0 : i32, i32, i32
  }
  func.func @transform_3(%arg0: i32) -> (i32, i32, i32) {
    %c0_i32 = arith.constant 0 : i32
    %c0_i32_0 = arith.constant 0 : i32
    %c0_i32_1 = arith.constant 0 : i32
    return %arg0, %c0_i32, %c0_i32_0 : i32, i32, i32
  }
  func.func @transform_4(%arg0: i32) -> (i32, i32) {
    %c0_i32 = arith.constant 0 : i32
    %c0_i32_0 = arith.constant 0 : i32
    %c0_i32_1 = arith.constant 0 : i32
    return %c0_i32, %c0_i32_0 : i32, i32
  }
  func.func @transform_5(%arg0: i32) -> (i32, i32) {
    %c0_i32 = arith.constant 0 : i32
    %c0_i32_0 = arith.constant 0 : i32
    %c0_i32_1 = arith.constant 0 : i32
    return %c0_i32, %c0_i32_0 : i32, i32
  }
}

</mosaic_0001>

<llo_original>
// kernel: jknet_forward.1
$region0: #{jknet_forward.1}
  #allocation0 [shape = 'u32[]', space=smem, size = 0x4, offset = 0x4, fixed_abs, tag = 'smem constant byte address 0x4 - core index']
  #allocation1 [shape = 'u32[144,128]{1,0:T(1,128)}', space=vmem, size = 0x12000, scoped, tag = 'internal scratch']
  #allocation2 [shape = 'bf16[256,128]{1,0:T(16,128)(2,1)}', space=vmem, size = 0x10000, scoped, tag = 'scratch operand']
  %s0 = inlined_call_operand.vmem [shape: bf16[256,256], index: 0, kind: input, shape index: {}]
  %s1 = inlined_call_operand.vmem [shape: f32[256,128], index: 1, kind: input, shape index: {}]
  %s2 = inlined_call_operand.vmem [shape: bf16[3,128,128], index: 2, kind: input, shape index: {}]
  %s3 = inlined_call_operand.vmem [shape: f32[3,1,128], index: 3, kind: input, shape index: {}]
  %s4 = inlined_call_operand.vmem [shape: f32[256,128], index: 4, kind: output, shape index: {0}]
  %s5 = inlined_call_operand.vmem [shape: s32[256,128], index: 5, kind: output, shape index: {1}]
  %6 = xla_tuple %s4, %s5
  %s7 = sld [smem:[#allocation0]]
  $region61: #{jknet_forward.1} parent=0
    _
  %s9 = ssub.s32 1, %s7
  %s10 = scalar_select 0, %s9, %s7
  loop: start=0, step=1, limit=5
  $region2: #{jknet_forward.1} parent=0 // loop_pre_header
    _
  $region3: #{jknet_forward.1} parent=0 // loop_header
    %s12 = sphi 0, %s16
    %p13 = scmp.ge.s32.totalorder %s12, 5
    %s20 = sphi 0, %s20
    %s22 = sphi 0, %s20
    %s23 = sphi 0, %s22
    %s37 = sphi 0, %s23
    %s41 = sphi 0, %s41
    %s43 = sphi 0, %s41
    %s44 = sphi 0, %s43
    %s58 = sphi 0, %s44
    %s64 = sphi 0, %s66
    %s67 = sphi 0, %s64
    %s68 = sphi 0, %s67
    %s84 = sphi 0, %s68
    %s90 = sphi 0, %s92
    %s93 = sphi 0, %s90
    %s94 = sphi 0, %s93
    %s110 = sphi 0, %s94
    %s114 = sphi 0, %s114
    %s116 = sphi 0, %s114
    %s117 = sphi 0, %s116
    %s131 = sphi 0, %s117
    %s135 = sphi 0, %s135
    %s137 = sphi 0, %s135
    %s138 = sphi 0, %s137
    %s152 = sphi 0, %s138
  $region4: #{jknet_forward.1} parent=0 // loop_header_branch
    %15 = sbr.rel (%p13) target = $region8
  $region5: #{jknet_forward.1} parent=0 // loop_body
    %s17 = ssub.s32 %s12, 1
    %s18 = ssub.s32 %s12, 2
    %s19 = sadd.s32 %s12, 1
    %s21 = sadd.s32 %s20, 1
    %p24 = scmp.eq.s32.totalorder %s12, 2
    %p25 = scmp.ne.s32.totalorder %s20, %s22
    %p26 = scmp.eq.s32.totalorder %s12, 0
    %p27 = por %p25, %p26
    %p28 = scmp.ne.s32.totalorder %s20, %s22
    %p29 = scmp.eq.s32.totalorder %s17, 2
    %p30 = por %p28, %p29
    %p31 = scmp.ne.s32.totalorder %s22, %s23
    %p32 = scmp.eq.s32.totalorder %s17, 0
    %p33 = por %p31, %p32
    %p34 = scmp.ne.s32.totalorder %s22, %s23
    %p35 = scmp.eq.s32.totalorder %s18, 2
    %p36 = por %p34, %p35
    %p38 = scmp.ne.s32.totalorder %s23, %s37
    %p39 = scmp.eq.s32.totalorder %s18, 0
    %p40 = por %p38, %p39
    %s42 = sadd.s32 %s41, 1
    %p45 = scmp.eq.s32.totalorder %s12, 2
    %p46 = scmp.ne.s32.totalorder %s41, %s43
    %p47 = scmp.eq.s32.totalorder %s12, 0
    %p48 = por %p46, %p47
    %p49 = scmp.ne.s32.totalorder %s41, %s43
    %p50 = scmp.eq.s32.totalorder %s17, 2
    %p51 = por %p49, %p50
    %p52 = scmp.ne.s32.totalorder %s43, %s44
    %p53 = scmp.eq.s32.totalorder %s17, 0
    %p54 = por %p52, %p53
    %p55 = scmp.ne.s32.totalorder %s43, %s44
    %p56 = scmp.eq.s32.totalorder %s18, 2
    %p57 = por %p55, %p56
    %p59 = scmp.ne.s32.totalorder %s44, %s58
    %p60 = scmp.eq.s32.totalorder %s18, 0
    %p61 = por %p59, %p60
    %s62 = ssub.s32 %s12, %s19
    %p63 = scmp.eq.s32.totalorder %s62, 0
    %s65 = sadd.s32 %s64, 1
    %s66 = scalar_select %p63, %s64, %s65
    %p69 = pneg %p63
    %p70 = scmp.eq.s32.totalorder %s12, 2
    %p71 = por %p69, %p70
    %p72 = scmp.ne.s32.totalorder %s64, %s67
    %p73 = scmp.eq.s32.totalorder %s12, 0
    %p74 = por %p72, %p73
    %p75 = scmp.ne.s32.totalorder %s64, %s67
    %p76 = scmp.eq.s32.totalorder %s17, 2
    %p77 = por %p75, %p76
    %p78 = scmp.ne.s32.totalorder %s67, %s68
    %p79 = scmp.eq.s32.totalorder %s17, 0
    %p80 = por %p78, %p79
    %p81 = scmp.ne.s32.totalorder %s67, %s68
    %p82 = scmp.eq.s32.totalorder %s18, 2
    %p83 = por %p81, %p82
    %p85 = scmp.ne.s32.totalorder %s68, %s84
    %p86 = scmp.eq.s32.totalorder %s18, 0
    %p87 = por %p85, %p86
    %s88 = ssub.s32 %s12, %s19
    %p89 = scmp.eq.s32.totalorder %s88, 0
    %s91 = sadd.s32 %s90, 1
    %s92 = scalar_select %p89, %s90, %s91
    %p95 = pneg %p89
    %p96 = scmp.eq.s32.totalorder %s12, 2
    %p97 = por %p95, %p96
    %p98 = scmp.ne.s32.totalorder %s90, %s93
    %p99 = scmp.eq.s32.totalorder %s12, 0
    %p100 = por %p98, %p99
    %p101 = scmp.ne.s32.totalorder %s90, %s93
    %p102 = scmp.eq.s32.totalorder %s17, 2
    %p103 = por %p101, %p102
    %p104 = scmp.ne.s32.totalorder %s93, %s94
    %p105 = scmp.eq.s32.totalorder %s17, 0
    %p106 = por %p104, %p105
    %p107 = scmp.ne.s32.totalorder %s93, %s94
    %p108 = scmp.eq.s32.totalorder %s18, 2
    %p109 = por %p107, %p108
    %p111 = scmp.ne.s32.totalorder %s94, %s110
    %p112 = scmp.eq.s32.totalorder %s18, 0
    %p113 = por %p111, %p112
    %s115 = sadd.s32 %s114, 1
    %p118 = scmp.eq.s32.totalorder %s12, 2
    %p119 = scmp.ne.s32.totalorder %s114, %s116
    %p120 = scmp.eq.s32.totalorder %s12, 0
    %p121 = por %p119, %p120
    %p122 = scmp.ne.s32.totalorder %s114, %s116
    %p123 = scmp.eq.s32.totalorder %s17, 2
    %p124 = por %p122, %p123
    %p125 = scmp.ne.s32.totalorder %s116, %s117
    %p126 = scmp.eq.s32.totalorder %s17, 0
    %p127 = por %p125, %p126
    %p128 = scmp.ne.s32.totalorder %s116, %s117
    %p129 = scmp.eq.s32.totalorder %s18, 2
    %p130 = por %p128, %p129
    %p132 = scmp.ne.s32.totalorder %s117, %s131
    %p133 = scmp.eq.s32.totalorder %s18, 0
    %p134 = por %p132, %p133
    %s136 = sadd.s32 %s135, 1
    %p139 = scmp.eq.s32.totalorder %s12, 2
    %p140 = scmp.ne.s32.totalorder %s135, %s137
    %p141 = scmp.eq.s32.totalorder %s12, 0
    %p142 = por %p140, %p141
    %p143 = scmp.ne.s32.totalorder %s135, %s137
    %p144 = scmp.eq.s32.totalorder %s17, 2
    %p145 = por %p143, %p144
    %p146 = scmp.ne.s32.totalorder %s137, %s138
    %p147 = scmp.eq.s32.totalorder %s17, 0
    %p148 = por %p146, %p147
    %p149 = scmp.ne.s32.totalorder %s137, %s138
    %p150 = scmp.eq.s32.totalorder %s18, 2
    %p151 = por %p149, %p150
    %p153 = scmp.ne.s32.totalorder %s138, %s152
    %p154 = scmp.eq.s32.totalorder %s18, 0
    %p155 = por %p153, %p154
    %p156 = scmp.le.s32.totalorder 1, %s12
    %p157 = scmp.lt.s32.totalorder %s12, 4
    %p158 = pnand %p156, %p157
    %p159 = pneg %p158
    // Predicated region
    $region9: #{jknet_forward.1} parent=5 // pred_check
      _
    $region10: #{jknet_forward.1} parent=5 // pred_check_branch
      %161 = sbr.rel (%p158) target = $region12
    $region11: #{jknet_forward.1} parent=5 // pred_region
      %s162 = ssub.s32 %s12, 1
      // Predicated region
      $region13: #{jknet_forward.1} parent=11 // pred_check
        %p163 = pneg %p33
      $region14: #{jknet_forward.1} parent=11 // pred_check_branch
        %165 = sbr.rel (%p163) target = $region16
      $region15: #{jknet_forward.1} parent=11 // pred_region
        _
      $region16: #{jknet_forward.1} parent=11 // pred_fallthru
        _
      // Predicated region
      $region17: #{jknet_forward.1} parent=11 // pred_check
        %p166 = pneg %p54
      $region18: #{jknet_forward.1} parent=11 // pred_check_branch
        %168 = sbr.rel (%p166) target = $region20
      $region19: #{jknet_forward.1} parent=11 // pred_region
        _
      $region20: #{jknet_forward.1} parent=11 // pred_fallthru
        _
    $region12: #{jknet_forward.1} parent=5 // pred_fallthru
      _
    %p169 = scmp.lt.s32.totalorder %s12, 3
    // Predicated region
    $region21: #{jknet_forward.1} parent=5 // pred_check
      %p170 = pneg %p169
    $region22: #{jknet_forward.1} parent=5 // pred_check_branch
      %172 = sbr.rel (%p170) target = $region24
    $region23: #{jknet_forward.1} parent=5 // pred_region
      // Predicated region
      $region25: #{jknet_forward.1} parent=23 // pred_check
        %p173 = pneg %p74
      $region26: #{jknet_forward.1} parent=23 // pred_check_branch
        %175 = sbr.rel (%p173) target = $region28
      $region27: #{jknet_forward.1} parent=23 // pred_region
        %p176 = scmp.lt.s32.totalorder %s12, 2
        %s177 = scalar_select %p176, %s12, 2
        %s178 = smul.addr %s177, 16
        %s179 = smul.addr %s178, 4
        %s180 = scalar_lea.vmem %s2, %s179
      $region28: #{jknet_forward.1} parent=23 // pred_fallthru
        _
      // Predicated region
      $region29: #{jknet_forward.1} parent=23 // pred_check
        %p181 = pneg %p100
      $region30: #{jknet_forward.1} parent=23 // pred_check_branch
        %183 = sbr.rel (%p181) target = $region32
      $region31: #{jknet_forward.1} parent=23 // pred_region
        %p184 = scmp.lt.s32.totalorder %s12, 2
        %s185 = scalar_select %p184, %s12, 2
        %s186 = scalar_lea.vmem %s3, %s185
      $region32: #{jknet_forward.1} parent=23 // pred_fallthru
        _
    $region24: #{jknet_forward.1} parent=5 // pred_fallthru
      _
    %p187 = scmp.le.s32.totalorder 1, %s12
    %p188 = scmp.lt.s32.totalorder %s12, 4
    %p189 = pnand %p187, %p188
    %p190 = pneg %p189
    // Predicated region
    $region33: #{jknet_forward.1} parent=5 // pred_check
      _
    $region34: #{jknet_forward.1} parent=5 // pred_check_branch
      %192 = sbr.rel (%p189) target = $region36
    $region35: #{jknet_forward.1} parent=5 // pred_region
      %s193 = ssub.s32 %s12, 1
      %p194 = pneg %p33
      %p195 = pneg %p30
      %p196 = pneg %p54
      %p197 = pneg %p51
      %p198 = scmp.lt.s32.totalorder %s17, 2
      %s199 = scalar_select %p198, %s17, 2
      %s200 = smul.addr %s199, 16
      %s201 = smul.addr %s200, 4
      %s202 = scalar_lea.vmem %s2, %s201
      %p203 = pneg %p80
      %p204 = pneg %p77
      %p205 = scmp.lt.s32.totalorder %s17, 2
      %s206 = scalar_select %p205, %s17, 2
      %s207 = scalar_lea.vmem %s3, %s206
      %p208 = pneg %p106
      %p209 = pneg %p103
      %p210 = pneg %p127
      %p211 = pneg %p124
      %p212 = pneg %p148
      %p213 = pneg %p145
      %p214 = scmp.lt.s32.totalorder %s17, 2
      %s215 = scalar_select %p214, %s17, 2
      %s216 = smul.addr %s215, 16
      %s217 = smul.addr %s216, 4
      %s218 = scalar_lea.vmem %s2, %s217
      %p219 = scmp.lt.s32.totalorder %s17, 2
      %s220 = scalar_select %p219, %s17, 2
      %s221 = scalar_lea.vmem %s3, %s220
      %p223 = scmp.eq.s32.totalorder %s17, 0
      // Predicated region
      $region37: #{jknet_forward.1} parent=35 // pred_check
        %p224 = pneg %p223
      $region38: #{jknet_forward.1} parent=35 // pred_check_branch
        %226 = sbr.rel (%p224) target = $region40
      $region39: #{jknet_forward.1} parent=35 // pred_region
        %v227 = vld [vmem:[%s1] sm:$0xff]
        %v228 = vld [vmem:[%s1 + $0x8] sm:$0xff]
        %v229 = vld [vmem:[%s1 + $0x10] sm:$0xff]
        %v230 = vld [vmem:[%s1 + $0x18] sm:$0xff]
        %v231 = vld [vmem:[%s1 + $0x20] sm:$0xff]
        %v232 = vld [vmem:[%s1 + $0x28] sm:$0xff]
        %v233 = vld [vmem:[%s1 + $0x30] sm:$0xff]
        %v234 = vld [vmem:[%s1 + $0x38] sm:$0xff]
        %v235 = vld [vmem:[%s1 + $0x40] sm:$0xff]
        %v236 = vld [vmem:[%s1 + $0x48] sm:$0xff]
        %v237 = vld [vmem:[%s1 + $0x50] sm:$0xff]
        %v238 = vld [vmem:[%s1 + $0x58] sm:$0xff]
        %v239 = vld [vmem:[%s1 + $0x60] sm:$0xff]
        %v240 = vld [vmem:[%s1 + $0x68] sm:$0xff]
        %v241 = vld [vmem:[%s1 + $0x70] sm:$0xff]
        %v242 = vld [vmem:[%s1 + $0x78] sm:$0xff]
        %v243 = vld [vmem:[%s1 + $0x80] sm:$0xff]
        %v244 = vld [vmem:[%s1 + $0x88] sm:$0xff]
        %v245 = vld [vmem:[%s1 + $0x90] sm:$0xff]
        %v246 = vld [vmem:[%s1 + $0x98] sm:$0xff]
        %v247 = vld [vmem:[%s1 + $0xa0] sm:$0xff]
        %v248 = vld [vmem:[%s1 + $0xa8] sm:$0xff]
        %v249 = vld [vmem:[%s1 + $0xb0] sm:$0xff]
        %v250 = vld [vmem:[%s1 + $0xb8] sm:$0xff]
        %v251 = vld [vmem:[%s1 + $0xc0] sm:$0xff]
        %v252 = vld [vmem:[%s1 + $0xc8] sm:$0xff]
        %v253 = vld [vmem:[%s1 + $0xd0] sm:$0xff]
        %v254 = vld [vmem:[%s1 + $0xd8] sm:$0xff]
        %v255 = vld [vmem:[%s1 + $0xe0] sm:$0xff]
        %v256 = vld [vmem:[%s1 + $0xe8] sm:$0xff]
        %v257 = vld [vmem:[%s1 + $0xf0] sm:$0xff]
        %v258 = vld [vmem:[%s1 + $0xf8] sm:$0xff]
        %v259 = vpack.c.bf16 %v228, %v227
        %v260 = vpack.c.bf16 %v230, %v229
        %v261 = vpack.c.bf16 %v232, %v231
        %v262 = vpack.c.bf16 %v234, %v233
        %v263 = vpack.c.bf16 %v236, %v235
        %v264 = vpack.c.bf16 %v238, %v237
        %v265 = vpack.c.bf16 %v240, %v239
        %v266 = vpack.c.bf16 %v242, %v241
        %v267 = vpack.c.bf16 %v244, %v243
        %v268 = vpack.c.bf16 %v246, %v245
        %v269 = vpack.c.bf16 %v248, %v247
        %v270 = vpack.c.bf16 %v250, %v249
        %v271 = vpack.c.bf16 %v252, %v251
        %v272 = vpack.c.bf16 %v254, %v253
        %v273 = vpack.c.bf16 %v256, %v255
        %v274 = vpack.c.bf16 %v258, %v257
        %275 = vst [vmem:[#allocation2] sm:$0xff] %v259
        %276 = vst [vmem:[#allocation2 + $0x8] sm:$0xff] %v260
        %277 = vst [vmem:[#allocation2 + $0x10] sm:$0xff] %v261
        %278 = vst [vmem:[#allocation2 + $0x18] sm:$0xff] %v262
        %279 = vst [vmem:[#allocation2 + $0x20] sm:$0xff] %v263
        %280 = vst [vmem:[#allocation2 + $0x28] sm:$0xff] %v264
        %281 = vst [vmem:[#allocation2 + $0x30] sm:$0xff] %v265
        %282 = vst [vmem:[#allocation2 + $0x38] sm:$0xff] %v266
        %283 = vst [vmem:[#allocation2 + $0x40] sm:$0xff] %v267
        %284 = vst [vmem:[#allocation2 + $0x48] sm:$0xff] %v268
        %285 = vst [vmem:[#allocation2 + $0x50] sm:$0xff] %v269
        %286 = vst [vmem:[#allocation2 + $0x58] sm:$0xff] %v270
        %287 = vst [vmem:[#allocation2 + $0x60] sm:$0xff] %v271
        %288 = vst [vmem:[#allocation2 + $0x68] sm:$0xff] %v272
        %289 = vst [vmem:[#allocation2 + $0x70] sm:$0xff] %v273
        %290 = vst [vmem:[#allocation2 + $0x78] sm:$0xff] %v274
        %291 = vst [vmem:[%s4] sm:$0xff] %v227
        %292 = vst [vmem:[%s4 + $0x8] sm:$0xff] %v228
        %293 = vst [vmem:[%s4 + $0x10] sm:$0xff] %v229
        %294 = vst [vmem:[%s4 + $0x18] sm:$0xff] %v230
        %295 = vst [vmem:[%s4 + $0x20] sm:$0xff] %v231
        %296 = vst [vmem:[%s4 + $0x28] sm:$0xff] %v232
        %297 = vst [vmem:[%s4 + $0x30] sm:$0xff] %v233
        %298 = vst [vmem:[%s4 + $0x38] sm:$0xff] %v234
        %299 = vst [vmem:[%s4 + $0x40] sm:$0xff] %v235
        %300 = vst [vmem:[%s4 + $0x48] sm:$0xff] %v236
        %301 = vst [vmem:[%s4 + $0x50] sm:$0xff] %v237
        %302 = vst [vmem:[%s4 + $0x58] sm:$0xff] %v238
        %303 = vst [vmem:[%s4 + $0x60] sm:$0xff] %v239
        %304 = vst [vmem:[%s4 + $0x68] sm:$0xff] %v240
        %305 = vst [vmem:[%s4 + $0x70] sm:$0xff] %v241
        %306 = vst [vmem:[%s4 + $0x78] sm:$0xff] %v242
        %307 = vst [vmem:[%s4 + $0x80] sm:$0xff] %v243
        %308 = vst [vmem:[%s4 + $0x88] sm:$0xff] %v244
        %309 = vst [vmem:[%s4 + $0x90] sm:$0xff] %v245
        %310 = vst [vmem:[%s4 + $0x98] sm:$0xff] %v246
        %311 = vst [vmem:[%s4 + $0xa0] sm:$0xff] %v247
        %312 = vst [vmem:[%s4 + $0xa8] sm:$0xff] %v248
        %313 = vst [vmem:[%s4 + $0xb0] sm:$0xff] %v249
        %314 = vst [vmem:[%s4 + $0xb8] sm:$0xff] %v250
        %315 = vst [vmem:[%s4 + $0xc0] sm:$0xff] %v251
        %316 = vst [vmem:[%s4 + $0xc8] sm:$0xff] %v252
        %317 = vst [vmem:[%s4 + $0xd0] sm:$0xff] %v253
        %318 = vst [vmem:[%s4 + $0xd8] sm:$0xff] %v254
        %319 = vst [vmem:[%s4 + $0xe0] sm:$0xff] %v255
        %320 = vst [vmem:[%s4 + $0xe8] sm:$0xff] %v256
        %321 = vst [vmem:[%s4 + $0xf0] sm:$0xff] %v257
        %322 = vst [vmem:[%s4 + $0xf8] sm:$0xff] %v258
        %323 = vst [vmem:[%s5] sm:$0xff] 0
        %324 = vst [vmem:[%s5 + $0x8] sm:$0xff] 0
        %325 = vst [vmem:[%s5 + $0x10] sm:$0xff] 0
        %326 = vst [vmem:[%s5 + $0x18] sm:$0xff] 0
        %327 = vst [vmem:[%s5 + $0x20] sm:$0xff] 0
        %328 = vst [vmem:[%s5 + $0x28] sm:$0xff] 0
        %329 = vst [vmem:[%s5 + $0x30] sm:$0xff] 0
        %330 = vst [vmem:[%s5 + $0x38] sm:$0xff] 0
        %331 = vst [vmem:[%s5 + $0x40] sm:$0xff] 0
        %332 = vst [vmem:[%s5 + $0x48] sm:$0xff] 0
        %333 = vst [vmem:[%s5 + $0x50] sm:$0xff] 0
        %334 = vst [vmem:[%s5 + $0x58] sm:$0xff] 0
        %335 = vst [vmem:[%s5 + $0x60] sm:$0xff] 0
        %336 = vst [vmem:[%s5 + $0x68] sm:$0xff] 0
        %337 = vst [vmem:[%s5 + $0x70] sm:$0xff] 0
        %338 = vst [vmem:[%s5 + $0x78] sm:$0xff] 0
        %339 = vst [vmem:[%s5 + $0x80] sm:$0xff] 0
        %340 = vst [vmem:[%s5 + $0x88] sm:$0xff] 0
        %341 = vst [vmem:[%s5 + $0x90] sm:$0xff] 0
        %342 = vst [vmem:[%s5 + $0x98] sm:$0xff] 0
        %343 = vst [vmem:[%s5 + $0xa0] sm:$0xff] 0
        %344 = vst [vmem:[%s5 + $0xa8] sm:$0xff] 0
        %345 = vst [vmem:[%s5 + $0xb0] sm:$0xff] 0
        %346 = vst [vmem:[%s5 + $0xb8] sm:$0xff] 0
        %347 = vst [vmem:[%s5 + $0xc0] sm:$0xff] 0
        %348 = vst [vmem:[%s5 + $0xc8] sm:$0xff] 0
        %349 = vst [vmem:[%s5 + $0xd0] sm:$0xff] 0
        %350 = vst [vmem:[%s5 + $0xd8] sm:$0xff] 0
        %351 = vst [vmem:[%s5 + $0xe0] sm:$0xff] 0
        %352 = vst [vmem:[%s5 + $0xe8] sm:$0xff] 0
        %353 = vst [vmem:[%s5 + $0xf0] sm:$0xff] 0
        %354 = vst [vmem:[%s5 + $0xf8] sm:$0xff] 0
      $region40: #{jknet_forward.1} parent=35 // pred_fallthru
        _
      %v355 = vld [vmem:[#allocation2] sm:$0xff]
      %v356 = vld [vmem:[#allocation2 + $0x8] sm:$0xff]
      %v357 = vld [vmem:[#allocation2 + $0x10] sm:$0xff]
      %v358 = vld [vmem:[#allocation2 + $0x18] sm:$0xff]
      %v359 = vld [vmem:[#allocation2 + $0x20] sm:$0xff]
      %v360 = vld [vmem:[#allocation2 + $0x28] sm:$0xff]
      %v361 = vld [vmem:[#allocation2 + $0x30] sm:$0xff]
      %v362 = vld [vmem:[#allocation2 + $0x38] sm:$0xff]
      %v363 = vld [vmem:[#allocation2 + $0x40] sm:$0xff]
      %v364 = vld [vmem:[#allocation2 + $0x48] sm:$0xff]
      %v365 = vld [vmem:[#allocation2 + $0x50] sm:$0xff]
      %v366 = vld [vmem:[#allocation2 + $0x58] sm:$0xff]
      %v367 = vld [vmem:[#allocation2 + $0x60] sm:$0xff]
      %v368 = vld [vmem:[#allocation2 + $0x68] sm:$0xff]
      %v369 = vld [vmem:[#allocation2 + $0x70] sm:$0xff]
      %v370 = vld [vmem:[#allocation2 + $0x78] sm:$0xff]
      %v371 = vld [vmem:[%s218] sm:$0xf]
      %v372 = vld [vmem:[%s218 + $0x4] sm:$0xf]
      %v373 = vld [vmem:[%s218 + $0x8] sm:$0xf]
      %v374 = vld [vmem:[%s218 + $0xc] sm:$0xf]
      %v375 = vld [vmem:[%s218 + $0x10] sm:$0xf]
      %v376 = vld [vmem:[%s218 + $0x14] sm:$0xf]
      %v377 = vld [vmem:[%s218 + $0x18] sm:$0xf]
      %v378 = vld [vmem:[%s218 + $0x1c] sm:$0xf]
      %v379 = vld [vmem:[%s218 + $0x20] sm:$0xf]
      %v380 = vld [vmem:[%s218 + $0x24] sm:$0xf]
      %v381 = vld [vmem:[%s218 + $0x28] sm:$0xf]
      %v382 = vld [vmem:[%s218 + $0x2c] sm:$0xf]
      %v383 = vld [vmem:[%s218 + $0x30] sm:$0xf]
      %v384 = vld [vmem:[%s218 + $0x34] sm:$0xf]
      %v385 = vld [vmem:[%s218 + $0x38] sm:$0xf]
      %v386 = vld [vmem:[%s218 + $0x3c] sm:$0xf]
      %v403 = vunpack.c.l.b16 %v371
      %v404 = vunpack.c.l.b16 %v372
      %v405 = vunpack.c.l.b16 %v373
      %v406 = vunpack.c.l.b16 %v374
      %v407 = vunpack.c.l.b16 %v375
      %v408 = vunpack.c.l.b16 %v376
      %v409 = vunpack.c.l.b16 %v377
      %v410 = vunpack.c.l.b16 %v378
      %v411 = vunpack.c.l.b16 %v379
      %v412 = vunpack.c.l.b16 %v380
      %v413 = vunpack.c.l.b16 %v381
      %v414 = vunpack.c.l.b16 %v382
      %v415 = vunpack.c.l.b16 %v383
      %v416 = vunpack.c.l.b16 %v384
      %v417 = vunpack.c.l.b16 %v385
      %v418 = vunpack.c.l.b16 %v386
      %v419 = vpack.c.b16 %v404, %v403
      %v420 = vpack.c.b16 %v406, %v405
      %v421 = vpack.c.b16 %v408, %v407
      %v422 = vpack.c.b16 %v410, %v409
      %v423 = vpack.c.b16 %v412, %v411
      %v424 = vpack.c.b16 %v414, %v413
      %v425 = vpack.c.b16 %v416, %v415
      %v426 = vpack.c.b16 %v418, %v417
      %435 = vmatprep.subr.bf16.mxu0 0
      %436 = vmatpush1.bf16.msra.mxu0 %v419
      %437 = vmatprep.subr.bf16.mxu0 0
      %438 = vmatpush1.bf16.msra.mxu0 %v420
      %439 = vmatprep.subr.bf16.mxu0 0
      %440 = vmatpush1.bf16.msra.mxu0 %v421
      %441 = vmatprep.subr.bf16.mxu0 0
      %442 = vmatpush1.bf16.msra.mxu0 %v422
      %443 = vmatprep.subr.bf16.mxu0 0
      %444 = vmatpush1.bf16.msra.mxu0 %v423
      %445 = vmatprep.subr.bf16.mxu0 0
      %446 = vmatpush1.bf16.msra.mxu0 %v424
      %447 = vmatprep.subr.bf16.mxu0 0
      %448 = vmatpush1.bf16.msra.mxu0 %v425
      %449 = vmatprep.subr.bf16.mxu0 0
      %450 = vmatpush1.bf16.msra.mxu0 %v426
      %451 = vmatprep.subr.bf16.mxu0 0
      %452 = vmatpush1.bf16.msra.mxu0 0
      %453 = vmatprep.subr.bf16.mxu0 0
      %454 = vmatpush1.bf16.msra.mxu0 0
      %455 = vmatprep.subr.bf16.mxu0 0
      %456 = vmatpush1.bf16.msra.mxu0 0
      %457 = vmatprep.subr.bf16.mxu0 0
      %458 = vmatpush1.bf16.msra.mxu0 0
      %459 = vmatprep.subr.bf16.mxu0 0
      %460 = vmatpush1.bf16.msra.mxu0 0
      %461 = vmatprep.subr.bf16.mxu0 0
      %462 = vmatpush1.bf16.msra.mxu0 0
      %463 = vmatprep.subr.bf16.mxu0 0
      %464 = vmatpush1.bf16.msra.mxu0 0
      %465 = vmatprep.subr.bf16.mxu0 0
      %466 = vmatpush1.bf16.msra.mxu0 0
      %467 = vmatprep.mubr.bf16.mxu0 0
      %468 = vmatmul.mubr.bf16.gmra.mrb[0].mxu0 %v355
      %v469 = vpop.f32.mrb[0].mxu0
      %v470 = vadd.f32 0.0, %v469
      %v471 = vpop.f32.mrb[0].mxu0
      %v472 = vpop.f32.mrb[0].mxu0
      %v473 = vadd.f32 0.0, %v472
      %v474 = vpop.f32.mrb[0].mxu0
      %475 = vmatprep.mubr.bf16.mxu0 0
      %476 = vmatmul.mubr.bf16.gmra.mrb[0].mxu0 %v356
      %v477 = vpop.f32.mrb[0].mxu0
      %v478 = vadd.f32 0.0, %v477
      %v479 = vpop.f32.mrb[0].mxu0
      %v480 = vpop.f32.mrb[0].mxu0
      %v481 = vadd.f32 0.0, %v480
      %v482 = vpop.f32.mrb[0].mxu0
      %483 = vmatprep.mubr.bf16.mxu0 0
      %484 = vmatmul.mubr.bf16.gmra.mrb[0].mxu0 %v357
      %v485 = vpop.f32.mrb[0].mxu0
      %v486 = vadd.f32 0.0, %v485
      %v487 = vpop.f32.mrb[0].mxu0
      %v488 = vpop.f32.mrb[0].mxu0
      %v489 = vadd.f32 0.0, %v488
      %v490 = vpop.f32.mrb[0].mxu0
      %491 = vmatprep.mubr.bf16.mxu0 0
      %492 = vmatmul.mubr.bf16.gmra.mrb[0].mxu0 %v358
      %v493 = vpop.f32.mrb[0].mxu0
      %v494 = vadd.f32 0.0, %v493
      %v495 = vpop.f32.mrb[0].mxu0
      %v496 = vpop.f32.mrb[0].mxu0
      %v497 = vadd.f32 0.0, %v496
      %v498 = vpop.f32.mrb[0].mxu0
      %499 = vmatprep.mubr.bf16.mxu0 0
      %500 = vmatmul.mubr.bf16.gmra.mrb[0].mxu0 %v359
      %v501 = vpop.f32.mrb[0].mxu0
      %v502 = vadd.f32 0.0, %v501
      %v503 = vpop.f32.mrb[0].mxu0
      %v504 = vpop.f32.mrb[0].mxu0
      %v505 = vadd.f32 0.0, %v504
      %v506 = vpop.f32.mrb[0].mxu0
      %507 = vmatprep.mubr.bf16.mxu0 0
      %508 = vmatmul.mubr.bf16.gmra.mrb[0].mxu0 %v360
      %v509 = vpop.f32.mrb[0].mxu0
      %v510 = vadd.f32 0.0, %v509
      %v511 = vpop.f32.mrb[0].mxu0
      %v512 = vpop.f32.mrb[0].mxu0
      %v513 = vadd.f32 0.0, %v512
      %v514 = vpop.f32.mrb[0].mxu0
      %515 = vmatprep.mubr.bf16.mxu0 0
      %516 = vmatmul.mubr.bf16.gmra.mrb[0].mxu0 %v361
      %v517 = vpop.f32.mrb[0].mxu0
      %v518 = vadd.f32 0.0, %v517
      %v519 = vpop.f32.mrb[0].mxu0
      %v520 = vpop.f32.mrb[0].mxu0
      %v521 = vadd.f32 0.0, %v520
      %v522 = vpop.f32.mrb[0].mxu0
      %523 = vmatprep.mubr.bf16.mxu0 0
      %524 = vmatmul.mubr.bf16.gmra.mrb[0].mxu0 %v362
      %v525 = vpop.f32.mrb[0].mxu0
      %v526 = vadd.f32 0.0, %v525
      %v527 = vpop.f32.mrb[0].mxu0
      %v528 = vpop.f32.mrb[0].mxu0
      %v529 = vadd.f32 0.0, %v528
      %v530 = vpop.f32.mrb[0].mxu0
      %531 = vmatprep.mubr.bf16.mxu0 0
      %532 = vmatmul.mubr.bf16.gmra.mrb[0].mxu0 %v363
      %v533 = vpop.f32.mrb[0].mxu0
      %v534 = vadd.f32 0.0, %v533
      %v535 = vpop.f32.mrb[0].mxu0
      %v536 = vpop.f32.mrb[0].mxu0
      %v537 = vadd.f32 0.0, %v536
      %v538 = vpop.f32.mrb[0].mxu0
      %539 = vmatprep.mubr.bf16.mxu0 0
      %540 = vmatmul.mubr.bf16.gmra.mrb[0].mxu0 %v364
      %v541 = vpop.f32.mrb[0].mxu0
      %v542 = vadd.f32 0.0, %v541
      %v543 = vpop.f32.mrb[0].mxu0
      %v544 = vpop.f32.mrb[0].mxu0
      %v545 = vadd.f32 0.0, %v544
      %v546 = vpop.f32.mrb[0].mxu0
      %547 = vmatprep.mubr.bf16.mxu0 0
      %548 = vmatmul.mubr.bf16.gmra.mrb[0].mxu0 %v365
      %v549 = vpop.f32.mrb[0].mxu0
      %v550 = vadd.f32 0.0, %v549
      %v551 = vpop.f32.mrb[0].mxu0
      %v552 = vpop.f32.mrb[0].mxu0
      %v553 = vadd.f32 0.0, %v552
      %v554 = vpop.f32.mrb[0].mxu0
      %555 = vmatprep.mubr.bf16.mxu0 0
      %556 = vmatmul.mubr.bf16.gmra.mrb[0].mxu0 %v366
      %v557 = vpop.f32.mrb[0].mxu0
      %v558 = vadd.f32 0.0, %v557
      %v559 = vpop.f32.mrb[0].mxu0
      %v560 = vpop.f32.mrb[0].mxu0
      %v561 = vadd.f32 0.0, %v560
      %v562 = vpop.f32.mrb[0].mxu0
      %563 = vmatprep.mubr.bf16.mxu0 0
      %564 = vmatmul.mubr.bf16.gmra.mrb[0].mxu0 %v367
      %v565 = vpop.f32.mrb[0].mxu0
      %v566 = vadd.f32 0.0, %v565
      %v567 = vpop.f32.mrb[0].mxu0
      %v568 = vpop.f32.mrb[0].mxu0
      %v569 = vadd.f32 0.0, %v568
      %v570 = vpop.f32.mrb[0].mxu0
      %571 = vmatprep.mubr.bf16.mxu0 0
      %572 = vmatmul.mubr.bf16.gmra.mrb[0].mxu0 %v368
      %v573 = vpop.f32.mrb[0].mxu0
      %v574 = vadd.f32 0.0, %v573
      %v575 = vpop.f32.mrb[0].mxu0
      %v576 = vpop.f32.mrb[0].mxu0
      %v577 = vadd.f32 0.0, %v576
      %v578 = vpop.f32.mrb[0].mxu0
      %579 = vmatprep.mubr.bf16.mxu0 0
      %580 = vmatmul.mubr.bf16.gmra.mrb[0].mxu0 %v369
      %v581 = vpop.f32.mrb[0].mxu0
      %v582 = vadd.f32 0.0, %v581
      %v583 = vpop.f32.mrb[0].mxu0
      %v584 = vpop.f32.mrb[0].mxu0
      %v585 = vadd.f32 0.0, %v584
      %v586 = vpop.f32.mrb[0].mxu0
      %587 = vmatprep.mubr.bf16.mxu0 0
      %588 = vmatmul.mubr.bf16.gmra.mrb[0].mxu0 %v370
      %v589 = vpop.f32.mrb[0].mxu0
      %v590 = vadd.f32 0.0, %v589
      %v591 = vpop.f32.mrb[0].mxu0
      %v592 = vpop.f32.mrb[0].mxu0
      %v593 = vadd.f32 0.0, %v592
      %v594 = vpop.f32.mrb[0].mxu0
      %595 = vdwg.mxu0
      %v596 = vld [vmem:[%s0] sm:$0xff]
      %v597 = vld [vmem:[%s0 + $0x8] sm:$0xff]
      %v598 = vld [vmem:[%s0 + $0x10] sm:$0xff]
      %v599 = vld [vmem:[%s0 + $0x18] sm:$0xff]
      %v600 = vld [vmem:[%s0 + $0x20] sm:$0xff]
      %v601 = vld [vmem:[%s0 + $0x28] sm:$0xff]
      %v602 = vld [vmem:[%s0 + $0x30] sm:$0xff]
      %v603 = vld [vmem:[%s0 + $0x38] sm:$0xff]
      %v604 = vld [vmem:[%s0 + $0x40] sm:$0xff]
      %v605 = vld [vmem:[%s0 + $0x48] sm:$0xff]
      %v606 = vld [vmem:[%s0 + $0x50] sm:$0xff]
      %v607 = vld [vmem:[%s0 + $0x58] sm:$0xff]
      %v608 = vld [vmem:[%s0 + $0x60] sm:$0xff]
      %v609 = vld [vmem:[%s0 + $0x68] sm:$0xff]
      %v610 = vld [vmem:[%s0 + $0x70] sm:$0xff]
      %v611 = vld [vmem:[%s0 + $0x78] sm:$0xff]
      %v612 = vld [vmem:[%s0 + $0x80] sm:$0xff]
      %v613 = vld [vmem:[%s0 + $0x88] sm:$0xff]
      %v614 = vld [vmem:[%s0 + $0x90] sm:$0xff]
      %v615 = vld [vmem:[%s0 + $0x98] sm:$0xff]
      %v616 = vld [vmem:[%s0 + $0xa0] sm:$0xff]
      %v617 = vld [vmem:[%s0 + $0xa8] sm:$0xff]
      %v618 = vld [vmem:[%s0 + $0xb0] sm:$0xff]
      %v619 = vld [vmem:[%s0 + $0xb8] sm:$0xff]
      %v620 = vld [vmem:[%s0 + $0xc0] sm:$0xff]
      %v621 = vld [vmem:[%s0 + $0xc8] sm:$0xff]
      %v622 = vld [vmem:[%s0 + $0xd0] sm:$0xff]
      %v623 = vld [vmem:[%s0 + $0xd8] sm:$0xff]
      %v624 = vld [vmem:[%s0 + $0xe0] sm:$0xff]
      %v625 = vld [vmem:[%s0 + $0xe8] sm:$0xff]
      %v626 = vld [vmem:[%s0 + $0xf0] sm:$0xff]
      %v627 = vld [vmem:[%s0 + $0xf8] sm:$0xff]
      %v628 = vpack.c.bf16 %v473, %v470
      %v629 = vpack.c.bf16 %v481, %v478
      %v630 = vpack.c.bf16 %v489, %v486
      %v631 = vpack.c.bf16 %v497, %v494
      %v632 = vpack.c.bf16 %v505, %v502
      %v633 = vpack.c.bf16 %v513, %v510
      %v634 = vpack.c.bf16 %v521, %v518
      %v635 = vpack.c.bf16 %v529, %v526
      %v636 = vpack.c.bf16 %v537, %v534
      %v637 = vpack.c.bf16 %v545, %v542
      %v638 = vpack.c.bf16 %v553, %v550
      %v639 = vpack.c.bf16 %v561, %v558
      %v640 = vpack.c.bf16 %v569, %v566
      %v641 = vpack.c.bf16 %v577, %v574
      %v642 = vpack.c.bf16 %v585, %v582
      %v643 = vpack.c.bf16 %v593, %v590
      %v644 = vld [vmem:[%s221] sm:$0x1]
      %v646 = vlaneseq
      %v647 = vshrl.u32 %v646, 7
      %v648 = vsub.s32 0, %v647
      %v649 = vrot.slane %v644, %v648
      %v683 = vunpack.c.l.b16 %v596
      %v684 = vunpack.c.h.b16 %v596
      %v685 = vunpack.c.l.b16 %v597
      %v686 = vunpack.c.h.b16 %v597
      %v687 = vunpack.c.l.b16 %v598
      %v688 = vunpack.c.h.b16 %v598
      %v689 = vunpack.c.l.b16 %v599
      %v690 = vunpack.c.h.b16 %v599
      %v691 = vunpack.c.l.b16 %v600
      %v692 = vunpack.c.h.b16 %v600
      %v693 = vunpack.c.l.b16 %v601
      %v694 = vunpack.c.h.b16 %v601
      %v695 = vunpack.c.l.b16 %v602
      %v696 = vunpack.c.h.b16 %v602
      %v697 = vunpack.c.l.b16 %v603
      %v698 = vunpack.c.h.b16 %v603
      %v699 = vunpack.c.l.b16 %v604
      %v700 = vunpack.c.h.b16 %v604
      %v701 = vunpack.c.l.b16 %v605
      %v702 = vunpack.c.h.b16 %v605
      %v703 = vunpack.c.l.b16 %v606
      %v704 = vunpack.c.h.b16 %v606
      %v705 = vunpack.c.l.b16 %v607
      %v706 = vunpack.c.h.b16 %v607
      %v707 = vunpack.c.l.b16 %v608
      %v708 = vunpack.c.h.b16 %v608
      %v709 = vunpack.c.l.b16 %v609
      %v710 = vunpack.c.h.b16 %v609
      %v711 = vunpack.c.l.b16 %v610
      %v712 = vunpack.c.h.b16 %v610
      %v713 = vunpack.c.l.b16 %v611
      %v714 = vunpack.c.h.b16 %v611
      %v715 = vunpack.c.l.b16 %v612
      %v716 = vunpack.c.h.b16 %v612
      %v717 = vunpack.c.l.b16 %v613
      %v718 = vunpack.c.h.b16 %v613
      %v719 = vunpack.c.l.b16 %v614
      %v720 = vunpack.c.h.b16 %v614
      %v721 = vunpack.c.l.b16 %v615
      %v722 = vunpack.c.h.b16 %v615
      %v723 = vunpack.c.l.b16 %v616
      %v724 = vunpack.c.h.b16 %v616
      %v725 = vunpack.c.l.b16 %v617
      %v726 = vunpack.c.h.b16 %v617
      %v727 = vunpack.c.l.b16 %v618
      %v728 = vunpack.c.h.b16 %v618
      %v729 = vunpack.c.l.b16 %v619
      %v730 = vunpack.c.h.b16 %v619
      %v731 = vunpack.c.l.b16 %v620
      %v732 = vunpack.c.h.b16 %v620
      %v733 = vunpack.c.l.b16 %v621
      %v734 = vunpack.c.h.b16 %v621
      %v735 = vunpack.c.l.b16 %v622
      %v736 = vunpack.c.h.b16 %v622
      %v737 = vunpack.c.l.b16 %v623
      %v738 = vunpack.c.h.b16 %v623
      %v739 = vunpack.c.l.b16 %v624
      %v740 = vunpack.c.h.b16 %v624
      %v741 = vunpack.c.l.b16 %v625
      %v742 = vunpack.c.h.b16 %v625
      %v743 = vunpack.c.l.b16 %v626
      %v744 = vunpack.c.h.b16 %v626
      %v745 = vunpack.c.l.b16 %v627
      %v746 = vunpack.c.h.b16 %v627
      %v747 = vpack.c.b16 %v685, %v683
      %v748 = vpack.c.b16 %v686, %v684
      %v749 = vpack.c.b16 %v689, %v687
      %v750 = vpack.c.b16 %v690, %v688
      %v751 = vpack.c.b16 %v693, %v691
      %v752 = vpack.c.b16 %v694, %v692
      %v753 = vpack.c.b16 %v697, %v695
      %v754 = vpack.c.b16 %v698, %v696
      %v755 = vpack.c.b16 %v701, %v699
      %v756 = vpack.c.b16 %v702, %v700
      %v757 = vpack.c.b16 %v705, %v703
      %v758 = vpack.c.b16 %v706, %v704
      %v759 = vpack.c.b16 %v709, %v707
      %v760 = vpack.c.b16 %v710, %v708
      %v761 = vpack.c.b16 %v713, %v711
      %v762 = vpack.c.b16 %v714, %v712
      %v763 = vpack.c.b16 %v717, %v715
      %v764 = vpack.c.b16 %v718, %v716
      %v765 = vpack.c.b16 %v721, %v719
      %v766 = vpack.c.b16 %v722, %v720
      %v767 = vpack.c.b16 %v725, %v723
      %v768 = vpack.c.b16 %v726, %v724
      %v769 = vpack.c.b16 %v729, %v727
      %v770 = vpack.c.b16 %v730, %v728
      %v771 = vpack.c.b16 %v733, %v731
      %v772 = vpack.c.b16 %v734, %v732
      %v773 = vpack.c.b16 %v737, %v735
      %v774 = vpack.c.b16 %v738, %v736
      %v775 = vpack.c.b16 %v741, %v739
      %v776 = vpack.c.b16 %v742, %v740
      %v777 = vpack.c.b16 %v745, %v743
      %v778 = vpack.c.b16 %v746, %v744
      %811 = vmatprep.subr.bf16.mxu0 0
      %812 = vmatpush1.bf16.msra.mxu0 %v628
      %813 = vmatprep.subr.bf16.mxu0 0
      %814 = vmatpush1.bf16.msra.mxu0 %v629
      %815 = vmatprep.subr.bf16.mxu0 0
      %816 = vmatpush1.bf16.msra.mxu0 %v630
      %817 = vmatprep.subr.bf16.mxu0 0
      %818 = vmatpush1.bf16.msra.mxu0 %v631
      %819 = vmatprep.subr.bf16.mxu0 0
      %820 = vmatpush1.bf16.msra.mxu0 %v632
      %821 = vmatprep.subr.bf16.mxu0 0
      %822 = vmatpush1.bf16.msra.mxu0 %v633
      %823 = vmatprep.subr.bf16.mxu0 0
      %824 = vmatpush1.bf16.msra.mxu0 %v634
      %825 = vmatprep.subr.bf16.mxu0 0
      %826 = vmatpush1.bf16.msra.mxu0 %v635
      %827 = vmatprep.subr.bf16.mxu0 0
      %828 = vmatpush1.bf16.msra.mxu0 %v636
      %829 = vmatprep.subr.bf16.mxu0 0
      %830 = vmatpush1.bf16.msra.mxu0 %v637
      %831 = vmatprep.subr.bf16.mxu0 0
      %832 = vmatpush1.bf16.msra.mxu0 %v638
      %833 = vmatprep.subr.bf16.mxu0 0
      %834 = vmatpush1.bf16.msra.mxu0 %v639
      %835 = vmatprep.subr.bf16.mxu0 0
      %836 = vmatpush1.bf16.msra.mxu0 %v640
      %837 = vmatprep.subr.bf16.mxu0 0
      %838 = vmatpush1.bf16.msra.mxu0 %v641
      %839 = vmatprep.subr.bf16.mxu0 0
      %840 = vmatpush1.bf16.msra.mxu0 %v642
      %841 = vmatprep.subr.bf16.mxu0 0
      %842 = vmatpush1.bf16.msra.mxu0 %v643
      %843 = vmatprep.mubr.bf16.mxu0 %v748
      %844 = vmatmul.mubr.bf16.gmra.mrb[0].mxu0 %v747
      %v845 = vpop.f32.mrb[0].mxu0
      %v846 = vadd.f32 %v649, %v845
      %v847 = vpop.f32.mrb[0].mxu0
      %v848 = vpop.f32.mrb[0].mxu0
      %v849 = vadd.f32 %v649, %v848
      %v850 = vpop.f32.mrb[0].mxu0
      %851 = vmatprep.mubr.bf16.mxu0 %v750
      %852 = vmatmul.mubr.bf16.gmra.mrb[0].mxu0 %v749
      %v853 = vpop.f32.mrb[0].mxu0
      %v854 = vadd.f32 %v649, %v853
      %v855 = vpop.f32.mrb[0].mxu0
      %v856 = vpop.f32.mrb[0].mxu0
      %v857 = vadd.f32 %v649, %v856
      %v858 = vpop.f32.mrb[0].mxu0
      %859 = vmatprep.mubr.bf16.mxu0 %v752
      %860 = vmatmul.mubr.bf16.gmra.mrb[0].mxu0 %v751
      %v861 = vpop.f32.mrb[0].mxu0
      %v862 = vadd.f32 %v649, %v861
      %v863 = vpop.f32.mrb[0].mxu0
      %v864 = vpop.f32.mrb[0].mxu0
      %v865 = vadd.f32 %v649, %v864
      %v866 = vpop.f32.mrb[0].mxu0
      %867 = vmatprep.mubr.bf16.mxu0 %v754
      %868 = vmatmul.mubr.bf16.gmra.mrb[0].mxu0 %v753
      %v869 = vpop.f32.mrb[0].mxu0
      %v870 = vadd.f32 %v649, %v869
      %v871 = vpop.f32.mrb[0].mxu0
      %v872 = vpop.f32.mrb[0].mxu0
      %v873 = vadd.f32 %v649, %v872
      %v874 = vpop.f32.mrb[0].mxu0
      %875 = vmatprep.mubr.bf16.mxu0 %v756
      %876 = vmatmul.mubr.bf16.gmra.mrb[0].mxu0 %v755
      %v877 = vpop.f32.mrb[0].mxu0
      %v878 = vadd.f32 %v649, %v877
      %v879 = vpop.f32.mrb[0].mxu0
      %v880 = vpop.f32.mrb[0].mxu0
      %v881 = vadd.f32 %v649, %v880
      %v882 = vpop.f32.mrb[0].mxu0
      %883 = vmatprep.mubr.bf16.mxu0 %v758
      %884 = vmatmul.mubr.bf16.gmra.mrb[0].mxu0 %v757
      %v885 = vpop.f32.mrb[0].mxu0
      %v886 = vadd.f32 %v649, %v885
      %v887 = vpop.f32.mrb[0].mxu0
      %v888 = vpop.f32.mrb[0].mxu0
      %v889 = vadd.f32 %v649, %v888
      %v890 = vpop.f32.mrb[0].mxu0
      %891 = vmatprep.mubr.bf16.mxu0 %v760
      %892 = vmatmul.mubr.bf16.gmra.mrb[0].mxu0 %v759
      %v893 = vpop.f32.mrb[0].mxu0
      %v894 = vadd.f32 %v649, %v893
      %v895 = vpop.f32.mrb[0].mxu0
      %v896 = vpop.f32.mrb[0].mxu0
      %v897 = vadd.f32 %v649, %v896
      %v898 = vpop.f32.mrb[0].mxu0
      %899 = vmatprep.mubr.bf16.mxu0 %v762
      %900 = vmatmul.mubr.bf16.gmra.mrb[0].mxu0 %v761
      %v901 = vpop.f32.mrb[0].mxu0
      %v902 = vadd.f32 %v649, %v901
      %v903 = vpop.f32.mrb[0].mxu0
      %v904 = vpop.f32.mrb[0].mxu0
      %v905 = vadd.f32 %v649, %v904
      %v906 = vpop.f32.mrb[0].mxu0
      %907 = vmatprep.mubr.bf16.mxu0 %v764
      %908 = vmatmul.mubr.bf16.gmra.mrb[0].mxu0 %v763
      %v909 = vpop.f32.mrb[0].mxu0
      %v910 = vadd.f32 %v649, %v909
      %v911 = vpop.f32.mrb[0].mxu0
      %v912 = vpop.f32.mrb[0].mxu0
      %v913 = vadd.f32 %v649, %v912
      %v914 = vpop.f32.mrb[0].mxu0
      %915 = vmatprep.mubr.bf16.mxu0 %v766
      %916 = vmatmul.mubr.bf16.gmra.mrb[0].mxu0 %v765
      %v917 = vpop.f32.mrb[0].mxu0
      %v918 = vadd.f32 %v649, %v917
      %v919 = vpop.f32.mrb[0].mxu0
      %v920 = vpop.f32.mrb[0].mxu0
      %v921 = vadd.f32 %v649, %v920
      %v922 = vpop.f32.mrb[0].mxu0
      %923 = vmatprep.mubr.bf16.mxu0 %v768
      %924 = vmatmul.mubr.bf16.gmra.mrb[0].mxu0 %v767
      %v925 = vpop.f32.mrb[0].mxu0
      %v926 = vadd.f32 %v649, %v925
      %v927 = vpop.f32.mrb[0].mxu0
      %v928 = vpop.f32.mrb[0].mxu0
      %v929 = vadd.f32 %v649, %v928
      %v930 = vpop.f32.mrb[0].mxu0
      %931 = vmatprep.mubr.bf16.mxu0 %v770
      %932 = vmatmul.mubr.bf16.gmra.mrb[0].mxu0 %v769
      %v933 = vpop.f32.mrb[0].mxu0
      %v934 = vadd.f32 %v649, %v933
      %v935 = vpop.f32.mrb[0].mxu0
      %v936 = vpop.f32.mrb[0].mxu0
      %v937 = vadd.f32 %v649, %v936
      %v938 = vpop.f32.mrb[0].mxu0
      %939 = vmatprep.mubr.bf16.mxu0 %v772
      %940 = vmatmul.mubr.bf16.gmra.mrb[0].mxu0 %v771
      %v941 = vpop.f32.mrb[0].mxu0
      %v942 = vadd.f32 %v649, %v941
      %v943 = vpop.f32.mrb[0].mxu0
      %v944 = vpop.f32.mrb[0].mxu0
      %v945 = vadd.f32 %v649, %v944
      %v946 = vpop.f32.mrb[0].mxu0
      %947 = vmatprep.mubr.bf16.mxu0 %v774
      %948 = vmatmul.mubr.bf16.gmra.mrb[0].mxu0 %v773
      %v949 = vpop.f32.mrb[0].mxu0
      %v950 = vadd.f32 %v649, %v949
      %v951 = vpop.f32.mrb[0].mxu0
      %v952 = vpop.f32.mrb[0].mxu0
      %v953 = vadd.f32 %v649, %v952
      %v954 = vpop.f32.mrb[0].mxu0
      %955 = vmatprep.mubr.bf16.mxu0 %v776
      %956 = vmatmul.mubr.bf16.gmra.mrb[0].mxu0 %v775
      %v957 = vpop.f32.mrb[0].mxu0
      %v958 = vadd.f32 %v649, %v957
      %v959 = vpop.f32.mrb[0].mxu0
      %v960 = vpop.f32.mrb[0].mxu0
      %v961 = vadd.f32 %v649, %v960
      %v962 = vpop.f32.mrb[0].mxu0
      %963 = vmatprep.mubr.bf16.mxu0 %v778
      %964 = vmatmul.mubr.bf16.gmra.mrb[0].mxu0 %v777
      %v965 = vpop.f32.mrb[0].mxu0
      %v966 = vadd.f32 %v649, %v965
      %v967 = vpop.f32.mrb[0].mxu0
      %v968 = vpop.f32.mrb[0].mxu0
      %v969 = vadd.f32 %v649, %v968
      %v970 = vpop.f32.mrb[0].mxu0
      %971 = vdwg.mxu0
      %vm972 = vcmp.ge.f32.partialorder %v846, 0.0
      %vm973 = vcmp.ge.f32.partialorder %v849, 0.0
      %vm974 = vcmp.ge.f32.partialorder %v854, 0.0
      %vm975 = vcmp.ge.f32.partialorder %v857, 0.0
      %vm976 = vcmp.ge.f32.partialorder %v862, 0.0
      %vm977 = vcmp.ge.f32.partialorder %v865, 0.0
      %vm978 = vcmp.ge.f32.partialorder %v870, 0.0
      %vm979 = vcmp.ge.f32.partialorder %v873, 0.0
      %vm980 = vcmp.ge.f32.partialorder %v878, 0.0
      %vm981 = vcmp.ge.f32.partialorder %v881, 0.0
      %vm982 = vcmp.ge.f32.partialorder %v886, 0.0
      %vm983 = vcmp.ge.f32.partialorder %v889, 0.0
      %vm984 = vcmp.ge.f32.partialorder %v894, 0.0
      %vm985 = vcmp.ge.f32.partialorder %v897, 0.0
      %vm986 = vcmp.ge.f32.partialorder %v902, 0.0
      %vm987 = vcmp.ge.f32.partialorder %v905, 0.0
      %vm988 = vcmp.ge.f32.partialorder %v910, 0.0
      %vm989 = vcmp.ge.f32.partialorder %v913, 0.0
      %vm990 = vcmp.ge.f32.partialorder %v918, 0.0
      %vm991 = vcmp.ge.f32.partialorder %v921, 0.0
      %vm992 = vcmp.ge.f32.partialorder %v926, 0.0
      %vm993 = vcmp.ge.f32.partialorder %v929, 0.0
      %vm994 = vcmp.ge.f32.partialorder %v934, 0.0
      %vm995 = vcmp.ge.f32.partialorder %v937, 0.0
      %vm996 = vcmp.ge.f32.partialorder %v942, 0.0
      %vm997 = vcmp.ge.f32.partialorder %v945, 0.0
      %vm998 = vcmp.ge.f32.partialorder %v950, 0.0
      %vm999 = vcmp.ge.f32.partialorder %v953, 0.0
      %vm1000 = vcmp.ge.f32.partialorder %v958, 0.0
      %vm1001 = vcmp.ge.f32.partialorder %v961, 0.0
      %vm1002 = vcmp.ge.f32.partialorder %v966, 0.0
      %vm1003 = vcmp.ge.f32.partialorder %v969, 0.0
      %v1004 = vmul.f32 %v846, 0.01
      %v1005 = vmul.f32 %v849, 0.01
      %v1006 = vmul.f32 %v854, 0.01
      %v1007 = vmul.f32 %v857, 0.01
      %v1008 = vmul.f32 %v862, 0.01
      %v1009 = vmul.f32 %v865, 0.01
      %v1010 = vmul.f32 %v870, 0.01
      %v1011 = vmul.f32 %v873, 0.01
      %v1012 = vmul.f32 %v878, 0.01
      %v1013 = vmul.f32 %v881, 0.01
      %v1014 = vmul.f32 %v886, 0.01
      %v1015 = vmul.f32 %v889, 0.01
      %v1016 = vmul.f32 %v894, 0.01
      %v1017 = vmul.f32 %v897, 0.01
      %v1018 = vmul.f32 %v902, 0.01
      %v1019 = vmul.f32 %v905, 0.01
      %v1020 = vmul.f32 %v910, 0.01
      %v1021 = vmul.f32 %v913, 0.01
      %v1022 = vmul.f32 %v918, 0.01
      %v1023 = vmul.f32 %v921, 0.01
      %v1024 = vmul.f32 %v926, 0.01
      %v1025 = vmul.f32 %v929, 0.01
      %v1026 = vmul.f32 %v934, 0.01
      %v1027 = vmul.f32 %v937, 0.01
      %v1028 = vmul.f32 %v942, 0.01
      %v1029 = vmul.f32 %v945, 0.01
      %v1030 = vmul.f32 %v950, 0.01
      %v1031 = vmul.f32 %v953, 0.01
      %v1032 = vmul.f32 %v958, 0.01
      %v1033 = vmul.f32 %v961, 0.01
      %v1034 = vmul.f32 %v966, 0.01
      %v1035 = vmul.f32 %v969, 0.01
      %v1036 = vsel %vm972, %v846, %v1004
      %v1037 = vsel %vm973, %v849, %v1005
      %v1038 = vsel %vm974, %v854, %v1006
      %v1039 = vsel %vm975, %v857, %v1007
      %v1040 = vsel %vm976, %v862, %v1008
      %v1041 = vsel %vm977, %v865, %v1009
      %v1042 = vsel %vm978, %v870, %v1010
      %v1043 = vsel %vm979, %v873, %v1011
      %v1044 = vsel %vm980, %v878, %v1012
      %v1045 = vsel %vm981, %v881, %v1013
      %v1046 = vsel %vm982, %v886, %v1014
      %v1047 = vsel %vm983, %v889, %v1015
      %v1048 = vsel %vm984, %v894, %v1016
      %v1049 = vsel %vm985, %v897, %v1017
      %v1050 = vsel %vm986, %v902, %v1018
      %v1051 = vsel %vm987, %v905, %v1019
      %v1052 = vsel %vm988, %v910, %v1020
      %v1053 = vsel %vm989, %v913, %v1021
      %v1054 = vsel %vm990, %v918, %v1022
      %v1055 = vsel %vm991, %v921, %v1023
      %v1056 = vsel %vm992, %v926, %v1024
      %v1057 = vsel %vm993, %v929, %v1025
      %v1058 = vsel %vm994, %v934, %v1026
      %v1059 = vsel %vm995, %v937, %v1027
      %v1060 = vsel %vm996, %v942, %v1028
      %v1061 = vsel %vm997, %v945, %v1029
      %v1062 = vsel %vm998, %v950, %v1030
      %v1063 = vsel %vm999, %v953, %v1031
      %v1064 = vsel %vm1000, %v958, %v1032
      %v1065 = vsel %vm1001, %v961, %v1033
      %v1066 = vsel %vm1002, %v966, %v1034
      %v1067 = vsel %vm1003, %v969, %v1035
      %v1068 = vld [vmem:[%s4] sm:$0xff]
      %v1069 = vld [vmem:[%s4 + $0x8] sm:$0xff]
      %v1070 = vld [vmem:[%s4 + $0x10] sm:$0xff]
      %v1071 = vld [vmem:[%s4 + $0x18] sm:$0xff]
      %v1072 = vld [vmem:[%s4 + $0x20] sm:$0xff]
      %v1073 = vld [vmem:[%s4 + $0x28] sm:$0xff]
      %v1074 = vld [vmem:[%s4 + $0x30] sm:$0xff]
      %v1075 = vld [vmem:[%s4 + $0x38] sm:$0xff]
      %v1076 = vld [vmem:[%s4 + $0x40] sm:$0xff]
      %v1077 = vld [vmem:[%s4 + $0x48] sm:$0xff]
      %v1078 = vld [vmem:[%s4 + $0x50] sm:$0xff]
      %v1079 = vld [vmem:[%s4 + $0x58] sm:$0xff]
      %v1080 = vld [vmem:[%s4 + $0x60] sm:$0xff]
      %v1081 = vld [vmem:[%s4 + $0x68] sm:$0xff]
      %v1082 = vld [vmem:[%s4 + $0x70] sm:$0xff]
      %v1083 = vld [vmem:[%s4 + $0x78] sm:$0xff]
      %v1084 = vld [vmem:[%s4 + $0x80] sm:$0xff]
      %v1085 = vld [vmem:[%s4 + $0x88] sm:$0xff]
      %v1086 = vld [vmem:[%s4 + $0x90] sm:$0xff]
      %v1087 = vld [vmem:[%s4 + $0x98] sm:$0xff]
      %v1088 = vld [vmem:[%s4 + $0xa0] sm:$0xff]
      %v1089 = vld [vmem:[%s4 + $0xa8] sm:$0xff]
      %v1090 = vld [vmem:[%s4 + $0xb0] sm:$0xff]
      %v1091 = vld [vmem:[%s4 + $0xb8] sm:$0xff]
      %v1092 = vld [vmem:[%s4 + $0xc0] sm:$0xff]
      %v1093 = vld [vmem:[%s4 + $0xc8] sm:$0xff]
      %v1094 = vld [vmem:[%s4 + $0xd0] sm:$0xff]
      %v1095 = vld [vmem:[%s4 + $0xd8] sm:$0xff]
      %v1096 = vld [vmem:[%s4 + $0xe0] sm:$0xff]
      %v1097 = vld [vmem:[%s4 + $0xe8] sm:$0xff]
      %v1098 = vld [vmem:[%s4 + $0xf0] sm:$0xff]
      %v1099 = vld [vmem:[%s4 + $0xf8] sm:$0xff]
      %vm1100 = vcmp.gt.f32.partialorder %v1036, %v1068
      %vm1101 = vcmp.gt.f32.partialorder %v1037, %v1069
      %vm1102 = vcmp.gt.f32.partialorder %v1038, %v1070
      %vm1103 = vcmp.gt.f32.partialorder %v1039, %v1071
      %vm1104 = vcmp.gt.f32.partialorder %v1040, %v1072
      %vm1105 = vcmp.gt.f32.partialorder %v1041, %v1073
      %vm1106 = vcmp.gt.f32.partialorder %v1042, %v1074
      %vm1107 = vcmp.gt.f32.partialorder %v1043, %v1075
      %vm1108 = vcmp.gt.f32.partialorder %v1044, %v1076
      %vm1109 = vcmp.gt.f32.partialorder %v1045, %v1077
      %vm1110 = vcmp.gt.f32.partialorder %v1046, %v1078
      %vm1111 = vcmp.gt.f32.partialorder %v1047, %v1079
      %vm1112 = vcmp.gt.f32.partialorder %v1048, %v1080
      %vm1113 = vcmp.gt.f32.partialorder %v1049, %v1081
      %vm1114 = vcmp.gt.f32.partialorder %v1050, %v1082
      %vm1115 = vcmp.gt.f32.partialorder %v1051, %v1083
      %vm1116 = vcmp.gt.f32.partialorder %v1052, %v1084
      %vm1117 = vcmp.gt.f32.partialorder %v1053, %v1085
      %vm1118 = vcmp.gt.f32.partialorder %v1054, %v1086
      %vm1119 = vcmp.gt.f32.partialorder %v1055, %v1087
      %vm1120 = vcmp.gt.f32.partialorder %v1056, %v1088
      %vm1121 = vcmp.gt.f32.partialorder %v1057, %v1089
      %vm1122 = vcmp.gt.f32.partialorder %v1058, %v1090
      %vm1123 = vcmp.gt.f32.partialorder %v1059, %v1091
      %vm1124 = vcmp.gt.f32.partialorder %v1060, %v1092
      %vm1125 = vcmp.gt.f32.partialorder %v1061, %v1093
      %vm1126 = vcmp.gt.f32.partialorder %v1062, %v1094
      %vm1127 = vcmp.gt.f32.partialorder %v1063, %v1095
      %vm1128 = vcmp.gt.f32.partialorder %v1064, %v1096
      %vm1129 = vcmp.gt.f32.partialorder %v1065, %v1097
      %vm1130 = vcmp.gt.f32.partialorder %v1066, %v1098
      %vm1131 = vcmp.gt.f32.partialorder %v1067, %v1099
      %s1132 = sadd.s32 %s17, 1
      %v1133 = vld [vmem:[%s5] sm:$0xff]
      %v1134 = vld [vmem:[%s5 + $0x8] sm:$0xff]
      %v1135 = vld [vmem:[%s5 + $0x10] sm:$0xff]
      %v1136 = vld [vmem:[%s5 + $0x18] sm:$0xff]
      %v1137 = vld [vmem:[%s5 + $0x20] sm:$0xff]
      %v1138 = vld [vmem:[%s5 + $0x28] sm:$0xff]
      %v1139 = vld [vmem:[%s5 + $0x30] sm:$0xff]
      %v1140 = vld [vmem:[%s5 + $0x38] sm:$0xff]
      %v1141 = vld [vmem:[%s5 + $0x40] sm:$0xff]
      %v1142 = vld [vmem:[%s5 + $0x48] sm:$0xff]
      %v1143 = vld [vmem:[%s5 + $0x50] sm:$0xff]
      %v1144 = vld [vmem:[%s5 + $0x58] sm:$0xff]
      %v1145 = vld [vmem:[%s5 + $0x60] sm:$0xff]
      %v1146 = vld [vmem:[%s5 + $0x68] sm:$0xff]
      %v1147 = vld [vmem:[%s5 + $0x70] sm:$0xff]
      %v1148 = vld [vmem:[%s5 + $0x78] sm:$0xff]
      %v1149 = vld [vmem:[%s5 + $0x80] sm:$0xff]
      %v1150 = vld [vmem:[%s5 + $0x88] sm:$0xff]
      %v1151 = vld [vmem:[%s5 + $0x90] sm:$0xff]
      %v1152 = vld [vmem:[%s5 + $0x98] sm:$0xff]
      %v1153 = vld [vmem:[%s5 + $0xa0] sm:$0xff]
      %v1154 = vld [vmem:[%s5 + $0xa8] sm:$0xff]
      %v1155 = vld [vmem:[%s5 + $0xb0] sm:$0xff]
      %v1156 = vld [vmem:[%s5 + $0xb8] sm:$0xff]
      %v1157 = vld [vmem:[%s5 + $0xc0] sm:$0xff]
      %v1158 = vld [vmem:[%s5 + $0xc8] sm:$0xff]
      %v1159 = vld [vmem:[%s5 + $0xd0] sm:$0xff]
      %v1160 = vld [vmem:[%s5 + $0xd8] sm:$0xff]
      %v1161 = vld [vmem:[%s5 + $0xe0] sm:$0xff]
      %v1162 = vld [vmem:[%s5 + $0xe8] sm:$0xff]
      %v1163 = vld [vmem:[%s5 + $0xf0] sm:$0xff]
      %v1164 = vld [vmem:[%s5 + $0xf8] sm:$0xff]
      %v1165 = vstv %s1132
      %v1166 = vsel %vm1100, %v1165, %v1133
      %v1167 = vsel %vm1101, %v1165, %v1134
      %v1168 = vsel %vm1102, %v1165, %v1135
      %v1169 = vsel %vm1103, %v1165, %v1136
      %v1170 = vsel %vm1104, %v1165, %v1137
      %v1171 = vsel %vm1105, %v1165, %v1138
      %v1172 = vsel %vm1106, %v1165, %v1139
      %v1173 = vsel %vm1107, %v1165, %v1140
      %v1174 = vsel %vm1108, %v1165, %v1141
      %v1175 = vsel %vm1109, %v1165, %v1142
      %v1176 = vsel %vm1110, %v1165, %v1143
      %v1177 = vsel %vm1111, %v1165, %v1144
      %v1178 = vsel %vm1112, %v1165, %v1145
      %v1179 = vsel %vm1113, %v1165, %v1146
      %v1180 = vsel %vm1114, %v1165, %v1147
      %v1181 = vsel %vm1115, %v1165, %v1148
      %v1182 = vsel %vm1116, %v1165, %v1149
      %v1183 = vsel %vm1117, %v1165, %v1150
      %v1184 = vsel %vm1118, %v1165, %v1151
      %v1185 = vsel %vm1119, %v1165, %v1152
      %v1186 = vsel %vm1120, %v1165, %v1153
      %v1187 = vsel %vm1121, %v1165, %v1154
      %v1188 = vsel %vm1122, %v1165, %v1155
      %v1189 = vsel %vm1123, %v1165, %v1156
      %v1190 = vsel %vm1124, %v1165, %v1157
      %v1191 = vsel %vm1125, %v1165, %v1158
      %v1192 = vsel %vm1126, %v1165, %v1159
      %v1193 = vsel %vm1127, %v1165, %v1160
      %v1194 = vsel %vm1128, %v1165, %v1161
      %v1195 = vsel %vm1129, %v1165, %v1162
      %v1196 = vsel %vm1130, %v1165, %v1163
      %v1197 = vsel %vm1131, %v1165, %v1164
      %1198 = vst [vmem:[%s5] sm:$0xff] %v1166
      %1199 = vst [vmem:[%s5 + $0x8] sm:$0xff] %v1167
      %1200 = vst [vmem:[%s5 + $0x10] sm:$0xff] %v1168
      %1201 = vst [vmem:[%s5 + $0x18] sm:$0xff] %v1169
      %1202 = vst [vmem:[%s5 + $0x20] sm:$0xff] %v1170
      %1203 = vst [vmem:[%s5 + $0x28] sm:$0xff] %v1171
      %1204 = vst [vmem:[%s5 + $0x30] sm:$0xff] %v1172
      %1205 = vst [vmem:[%s5 + $0x38] sm:$0xff] %v1173
      %1206 = vst [vmem:[%s5 + $0x40] sm:$0xff] %v1174
      %1207 = vst [vmem:[%s5 + $0x48] sm:$0xff] %v1175
      %1208 = vst [vmem:[%s5 + $0x50] sm:$0xff] %v1176
      %1209 = vst [vmem:[%s5 + $0x58] sm:$0xff] %v1177
      %1210 = vst [vmem:[%s5 + $0x60] sm:$0xff] %v1178
      %1211 = vst [vmem:[%s5 + $0x68] sm:$0xff] %v1179
      %1212 = vst [vmem:[%s5 + $0x70] sm:$0xff] %v1180
      %1213 = vst [vmem:[%s5 + $0x78] sm:$0xff] %v1181
      %1214 = vst [vmem:[%s5 + $0x80] sm:$0xff] %v1182
      %1215 = vst [vmem:[%s5 + $0x88] sm:$0xff] %v1183
      %1216 = vst [vmem:[%s5 + $0x90] sm:$0xff] %v1184
      %1217 = vst [vmem:[%s5 + $0x98] sm:$0xff] %v1185
      %1218 = vst [vmem:[%s5 + $0xa0] sm:$0xff] %v1186
      %1219 = vst [vmem:[%s5 + $0xa8] sm:$0xff] %v1187
      %1220 = vst [vmem:[%s5 + $0xb0] sm:$0xff] %v1188
      %1221 = vst [vmem:[%s5 + $0xb8] sm:$0xff] %v1189
      %1222 = vst [vmem:[%s5 + $0xc0] sm:$0xff] %v1190
      %1223 = vst [vmem:[%s5 + $0xc8] sm:$0xff] %v1191
      %1224 = vst [vmem:[%s5 + $0xd0] sm:$0xff] %v1192
      %1225 = vst [vmem:[%s5 + $0xd8] sm:$0xff] %v1193
      %1226 = vst [vmem:[%s5 + $0xe0] sm:$0xff] %v1194
      %1227 = vst [vmem:[%s5 + $0xe8] sm:$0xff] %v1195
      %1228 = vst [vmem:[%s5 + $0xf0] sm:$0xff] %v1196
      %1229 = vst [vmem:[%s5 + $0xf8] sm:$0xff] %v1197
      %v1230 = vmax.f32 %v1068, %v1036
      %v1231 = vmax.f32 %v1069, %v1037
      %v1232 = vmax.f32 %v1070, %v1038
      %v1233 = vmax.f32 %v1071, %v1039
      %v1234 = vmax.f32 %v1072, %v1040
      %v1235 = vmax.f32 %v1073, %v1041
      %v1236 = vmax.f32 %v1074, %v1042
      %v1237 = vmax.f32 %v1075, %v1043
      %v1238 = vmax.f32 %v1076, %v1044
      %v1239 = vmax.f32 %v1077, %v1045
      %v1240 = vmax.f32 %v1078, %v1046
      %v1241 = vmax.f32 %v1079, %v1047
      %v1242 = vmax.f32 %v1080, %v1048
      %v1243 = vmax.f32 %v1081, %v1049
      %v1244 = vmax.f32 %v1082, %v1050
      %v1245 = vmax.f32 %v1083, %v1051
      %v1246 = vmax.f32 %v1084, %v1052
      %v1247 = vmax.f32 %v1085, %v1053
      %v1248 = vmax.f32 %v1086, %v1054
      %v1249 = vmax.f32 %v1087, %v1055
      %v1250 = vmax.f32 %v1088, %v1056
      %v1251 = vmax.f32 %v1089, %v1057
      %v1252 = vmax.f32 %v1090, %v1058
      %v1253 = vmax.f32 %v1091, %v1059
      %v1254 = vmax.f32 %v1092, %v1060
      %v1255 = vmax.f32 %v1093, %v1061
      %v1256 = vmax.f32 %v1094, %v1062
      %v1257 = vmax.f32 %v1095, %v1063
      %v1258 = vmax.f32 %v1096, %v1064
      %v1259 = vmax.f32 %v1097, %v1065
      %v1260 = vmax.f32 %v1098, %v1066
      %v1261 = vmax.f32 %v1099, %v1067
      %1262 = vst [vmem:[%s4] sm:$0xff] %v1230
      %1263 = vst [vmem:[%s4 + $0x8] sm:$0xff] %v1231
      %1264 = vst [vmem:[%s4 + $0x10] sm:$0xff] %v1232
      %1265 = vst [vmem:[%s4 + $0x18] sm:$0xff] %v1233
      %1266 = vst [vmem:[%s4 + $0x20] sm:$0xff] %v1234
      %1267 = vst [vmem:[%s4 + $0x28] sm:$0xff] %v1235
      %1268 = vst [vmem:[%s4 + $0x30] sm:$0xff] %v1236
      %1269 = vst [vmem:[%s4 + $0x38] sm:$0xff] %v1237
      %1270 = vst [vmem:[%s4 + $0x40] sm:$0xff] %v1238
      %1271 = vst [vmem:[%s4 + $0x48] sm:$0xff] %v1239
      %1272 = vst [vmem:[%s4 + $0x50] sm:$0xff] %v1240
      %1273 = vst [vmem:[%s4 + $0x58] sm:$0xff] %v1241
      %1274 = vst [vmem:[%s4 + $0x60] sm:$0xff] %v1242
      %1275 = vst [vmem:[%s4 + $0x68] sm:$0xff] %v1243
      %1276 = vst [vmem:[%s4 + $0x70] sm:$0xff] %v1244
      %1277 = vst [vmem:[%s4 + $0x78] sm:$0xff] %v1245
      %1278 = vst [vmem:[%s4 + $0x80] sm:$0xff] %v1246
      %1279 = vst [vmem:[%s4 + $0x88] sm:$0xff] %v1247
      %1280 = vst [vmem:[%s4 + $0x90] sm:$0xff] %v1248
      %1281 = vst [vmem:[%s4 + $0x98] sm:$0xff] %v1249
      %1282 = vst [vmem:[%s4 + $0xa0] sm:$0xff] %v1250
      %1283 = vst [vmem:[%s4 + $0xa8] sm:$0xff] %v1251
      %1284 = vst [vmem:[%s4 + $0xb0] sm:$0xff] %v1252
      %1285 = vst [vmem:[%s4 + $0xb8] sm:$0xff] %v1253
      %1286 = vst [vmem:[%s4 + $0xc0] sm:$0xff] %v1254
      %1287 = vst [vmem:[%s4 + $0xc8] sm:$0xff] %v1255
      %1288 = vst [vmem:[%s4 + $0xd0] sm:$0xff] %v1256
      %1289 = vst [vmem:[%s4 + $0xd8] sm:$0xff] %v1257
      %1290 = vst [vmem:[%s4 + $0xe0] sm:$0xff] %v1258
      %1291 = vst [vmem:[%s4 + $0xe8] sm:$0xff] %v1259
      %1292 = vst [vmem:[%s4 + $0xf0] sm:$0xff] %v1260
      %1293 = vst [vmem:[%s4 + $0xf8] sm:$0xff] %v1261
      %v1294 = vpack.c.bf16 %v1037, %v1036
      %v1295 = vpack.c.bf16 %v1039, %v1038
      %v1296 = vpack.c.bf16 %v1041, %v1040
      %v1297 = vpack.c.bf16 %v1043, %v1042
      %v1298 = vpack.c.bf16 %v1045, %v1044
      %v1299 = vpack.c.bf16 %v1047, %v1046
      %v1300 = vpack.c.bf16 %v1049, %v1048
      %v1301 = vpack.c.bf16 %v1051, %v1050
      %v1302 = vpack.c.bf16 %v1053, %v1052
      %v1303 = vpack.c.bf16 %v1055, %v1054
      %v1304 = vpack.c.bf16 %v1057, %v1056
      %v1305 = vpack.c.bf16 %v1059, %v1058
      %v1306 = vpack.c.bf16 %v1061, %v1060
      %v1307 = vpack.c.bf16 %v1063, %v1062
      %v1308 = vpack.c.bf16 %v1065, %v1064
      %v1309 = vpack.c.bf16 %v1067, %v1066
      %1310 = vst [vmem:[#allocation2] sm:$0xff] %v1294
      %1311 = vst [vmem:[#allocation2 + $0x8] sm:$0xff] %v1295
      %1312 = vst [vmem:[#allocation2 + $0x10] sm:$0xff] %v1296
      %1313 = vst [vmem:[#allocation2 + $0x18] sm:$0xff] %v1297
      %1314 = vst [vmem:[#allocation2 + $0x20] sm:$0xff] %v1298
      %1315 = vst [vmem:[#allocation2 + $0x28] sm:$0xff] %v1299
      %1316 = vst [vmem:[#allocation2 + $0x30] sm:$0xff] %v1300
      %1317 = vst [vmem:[#allocation2 + $0x38] sm:$0xff] %v1301
      %1318 = vst [vmem:[#allocation2 + $0x40] sm:$0xff] %v1302
      %1319 = vst [vmem:[#allocation2 + $0x48] sm:$0xff] %v1303
      %1320 = vst [vmem:[#allocation2 + $0x50] sm:$0xff] %v1304
      %1321 = vst [vmem:[#allocation2 + $0x58] sm:$0xff] %v1305
      %1322 = vst [vmem:[#allocation2 + $0x60] sm:$0xff] %v1306
      %1323 = vst [vmem:[#allocation2 + $0x68] sm:$0xff] %v1307
      %1324 = vst [vmem:[#allocation2 + $0x70] sm:$0xff] %v1308
      %1325 = vst [vmem:[#allocation2 + $0x78] sm:$0xff] %v1309
      // Predicated region
      $region41: #{jknet_forward.1} parent=35 // pred_check
        %p1326 = pneg %p124
      $region42: #{jknet_forward.1} parent=35 // pred_check_branch
        %1328 = sbr.rel (%p1326) target = $region44
      $region43: #{jknet_forward.1} parent=35 // pred_region
        _
      $region44: #{jknet_forward.1} parent=35 // pred_fallthru
        _
      // Predicated region
      $region45: #{jknet_forward.1} parent=35 // pred_check
        %p1329 = pneg %p145
      $region46: #{jknet_forward.1} parent=35 // pred_check_branch
        %1331 = sbr.rel (%p1329) target = $region48
      $region47: #{jknet_forward.1} parent=35 // pred_region
        _
      $region48: #{jknet_forward.1} parent=35 // pred_fallthru
        _
      // Predicated region
      $region49: #{jknet_forward.1} parent=35 // pred_check
        %p1332 = pneg %p124
      $region50: #{jknet_forward.1} parent=35 // pred_check_branch
        %1334 = sbr.rel (%p1332) target = $region52
      $region51: #{jknet_forward.1} parent=35 // pred_region
        _
      $region52: #{jknet_forward.1} parent=35 // pred_fallthru
        _
      // Predicated region
      $region53: #{jknet_forward.1} parent=35 // pred_check
        %p1335 = pneg %p145
      $region54: #{jknet_forward.1} parent=35 // pred_check_branch
        %1337 = sbr.rel (%p1335) target = $region56
      $region55: #{jknet_forward.1} parent=35 // pred_region
        _
      $region56: #{jknet_forward.1} parent=35 // pred_fallthru
        _
    $region36: #{jknet_forward.1} parent=5 // pred_fallthru
      _
    %p1338 = scmp.le.s32.totalorder 2, %s12
    // Predicated region
    $region57: #{jknet_forward.1} parent=5 // pred_check
      %p1339 = pneg %p1338
    $region58: #{jknet_forward.1} parent=5 // pred_check_branch
      %1341 = sbr.rel (%p1339) target = $region60
    $region59: #{jknet_forward.1} parent=5 // pred_region
      %s1342 = ssub.s32 %s12, 2
    $region60: #{jknet_forward.1} parent=5 // pred_fallthru
      _
  $region6: #{jknet_forward.1} parent=0 // loop_footer
    %s16 = sadd.s32 1, %s12
  $region7: #{jknet_forward.1} parent=0 // loop_footer_branch
    %11 = sbr.rel target = $region3
  $region8: #{jknet_forward.1} parent=0 // loop_exit
    _

</llo_original>
